<compile_context>
chip_gen: v6e
topology: v6e:2x2x1
jax: 0.10.0
libtpu: 0.0.40
codegen_flags: <defaults>
</compile_context>

<pallas_src>
import numpy as np
import jax
import jax.numpy as jnp
from jax.experimental import pallas as pl
from jax.experimental.pallas import tpu as pltpu


NEG_MASK = -1e30  # large finite negative: ReLU turns masked columns into exact 0


# ----------------------------------------------------------------------------
# Pallas kernel: one (batch n, K-tile kt, C-tile ct) grid step.
# ----------------------------------------------------------------------------
def pyramid_kernel(x_ref, pool_ref, w_ref, shift_ref, up_ref, o_ref, acc_ref):
    # x_ref     : (1, tc, HWp) bf16  input channel tile, flattened/padded spatial
    # pool_ref  : (HWp, PPp)   bf16  stacked adaptive-avg-pool operators (4 branches)
    # w_ref     : (tk, tc)     bf16  stacked 1x1 conv weights (BN scale folded in)
    # shift_ref : (tk, PPp)    f32   BN shift broadcast over PP columns; NEG_MASK on
    #                                cross-branch / padding columns (mask folded in)
    # up_ref    : (PPp, HWp)   bf16  stacked bilinear (align_corners=True) operators
    # o_ref     : (1, tk, HWp) f32   branch outputs for this K tile
    # acc_ref   : (tk, PPp)    f32   VMEM accumulator over the C (contraction) axis
    ct = pl.program_id(2)

    @pl.when(ct == 0)
    def _init():
        acc_ref[...] = jnp.zeros_like(acc_ref)

    # Adaptive average pooling of this channel tile (all 4 branch grids at once).
    x = x_ref[0]                                                         # (tc, HWp)
    pooled = jnp.dot(x, pool_ref[...],
                     preferred_element_type=jnp.float32)                 # (tc, PPp)

    # Partial 1x1 conv (BN scale folded into W); accumulate over C tiles.
    acc_ref[...] += jnp.dot(w_ref[...], pooled.astype(w_ref.dtype),
                            preferred_element_type=jnp.float32)          # (tk, PPp)

    @pl.when(ct == pl.num_programs(2) - 1)
    def _finalize():
        # BN shift + ReLU; NEG_MASK entries zero cross-branch / padding columns.
        y = jnp.maximum(acc_ref[...] + shift_ref[...], 0.0)              # (tk, PPp)
        # Bilinear upsample (align_corners=True) straight into the output tile.
        o_ref[0, :, :] = jnp.dot(y.astype(up_ref.dtype), up_ref[...],
                                 preferred_element_type=jnp.float32
                                 ).astype(o_ref.dtype)                   # (tk, HWp)


# ----------------------------------------------------------------------------
# Operator-matrix construction (static NumPy constants, PyTorch semantics).
# ----------------------------------------------------------------------------
def adaptive_pool_matrix(out_size, in_size):
    """Row i averages x[start:end] with PyTorch AdaptiveAvgPool bin edges."""
    m = np.zeros((out_size, in_size), dtype=np.float32)
    for i in range(out_size):
        start = (i * in_size) // out_size
        end = -((-(i + 1) * in_size) // out_size)  # ceil((i+1)*in/out)
        m[i, start:end] = 1.0 / (end - start)
    return m


def bilinear_matrix(out_size, in_size):
    """Row o holds the interpolation weights (align_corners=True)."""
    m = np.zeros((out_size, in_size), dtype=np.float32)
    if in_size == 1:
        m[:, 0] = 1.0
        return m
    for o in range(out_size):
        src = o * (in_size - 1) / (out_size - 1) if out_size > 1 else 0.0
        i0 = min(int(np.floor(src)), in_size - 1)
        i1 = min(i0 + 1, in_size - 1)
        frac = src - i0
        m[o, i0] += 1.0 - frac
        m[o, i1] += frac
    return m


def _round_up(v, m):
    return ((v + m - 1) // m) * m


def build_fused_operands(params, pool_sizes, H, W, compute_dtype=jnp.bfloat16):
    """Build padded, pre-transposed fused operands for all 4 branches."""
    HW = H * W
    HWp = _round_up(HW, 128)
    PP = int(sum(p * p for p in pool_sizes))
    PPp = _round_up(PP, 128)
    K = int(sum(np.asarray(w).shape[0] for w, _, _ in params))
    C = int(np.asarray(params[0][0]).shape[1])

    pool_all = np.zeros((HWp, PPp), np.float32)          # zero pad rows/cols
    up_all = np.zeros((PPp, HWp), np.float32)            # zero pad rows/cols
    w_stack = np.zeros((K, C), np.float32)
    shift_stack = np.full((K, PPp), NEG_MASK, np.float32)  # mask folded into shift

    row_off, col_off = 0, 0
    for p, (w, scale, shift) in zip(pool_sizes, params):
        w_np = np.asarray(w, np.float32)
        scale_np = np.asarray(scale, np.float32)
        shift_np = np.asarray(shift, np.float32)
        cout = w_np.shape[0]
        pp = p * p

        pool_all[:HW, col_off:col_off + pp] = np.kron(
            adaptive_pool_matrix(p, H), adaptive_pool_matrix(p, W)).T
        up_all[col_off:col_off + pp, :HW] = np.kron(
            bilinear_matrix(H, p), bilinear_matrix(W, p)).T
        w_stack[row_off:row_off + cout, :] = scale_np[:, None] * w_np  # fold BN scale
        shift_stack[row_off:row_off + cout, col_off:col_off + pp] = shift_np[:, None]

        row_off += cout
        col_off += pp

    return (jnp.asarray(pool_all, compute_dtype),
            jnp.asarray(w_stack, compute_dtype),
            jnp.asarray(shift_stack, jnp.float32),
            jnp.asarray(up_all, compute_dtype),
            HWp, PPp, K)


def _pick_tile(dim):
    """Largest of {256, 128} that evenly tiles `dim`, else the full dim."""
    for t in (256, 128):
        if dim > t and dim % t == 0:
            return t
    return dim


# ----------------------------------------------------------------------------
# pallas_call wrapper.
# ----------------------------------------------------------------------------
def _pyramid_call(x_flat, pool_all, w_stack, shift_stack, up_all, *, grid,
                  tc, tk, N, K, C, HWp, PPp, single_buffer_consts):
    cdt = x_flat.dtype
    esz = jnp.dtype(cdt).itemsize

    def const_spec(shape):
        index_map = lambda n, kt, ct: (0, 0)
        if single_buffer_consts and hasattr(pl, "Buffered"):
            # Grid-invariant operand: one VMEM buffer is enough (saves VMEM).
            return pl.BlockSpec(shape, index_map, pipeline_mode=pl.Buffered(1))
        return pl.BlockSpec(shape, index_map)

    const_bufs = 1 if single_buffer_consts else 2
    vmem_need = (2 * tc * HWp * esz          # x tile (double-buffered)
                 + 2 * tk * tc * esz         # weight tile
                 + 2 * tk * PPp * 4          # shift tile
                 + const_bufs * HWp * PPp * esz   # pooling operator
                 + const_bufs * PPp * HWp * esz   # upsample operator
                 + 2 * tk * HWp * 4          # output tile
                 + tk * PPp * 4              # accumulator scratch
                 + (8 << 20))                # Mosaic internal headroom
    try:
        cap = int(getattr(pltpu.get_tpu_info(), "vmem_capacity_bytes", 64 << 20))
    except Exception:
        cap = 64 << 20                       # conservative: v7x per-TC VMEM
    vmem_limit = int(min(max(vmem_need, 32 << 20), int(0.9 * cap)))

    flops = 2 * N * (C * HWp * PPp + K * C * PPp + K * PPp * HWp)
    bytes_accessed = (N * C * HWp * esz + HWp * PPp * esz + K * C * esz
                      + K * PPp * 4 + PPp * HWp * esz + N * K * HWp * 4)
    try:
        cost = pl.CostEstimate(flops=flops, transcendentals=0,
                               bytes_accessed=bytes_accessed)
    except Exception:
        cost = None

    return pl.pallas_call(
        pyramid_kernel,
        out_shape=jax.ShapeDtypeStruct((N, K, HWp), jnp.float32),
        grid=grid,
        in_specs=[
            pl.BlockSpec((1, tc, HWp), lambda n, kt, ct: (n, ct, 0)),
            const_spec((HWp, PPp)),
            pl.BlockSpec((tk, tc), lambda n, kt, ct: (kt, ct)),
            pl.BlockSpec((tk, PPp), lambda n, kt, ct: (kt, 0)),
            const_spec((PPp, HWp)),
        ],
        out_specs=pl.BlockSpec((1, tk, HWp), lambda n, kt, ct: (n, kt, 0)),
        scratch_shapes=[pltpu.VMEM((tk, PPp), jnp.float32)],
        compiler_params=pltpu.CompilerParams(
            dimension_semantics=("parallel", "parallel", "arbitrary"),
            vmem_limit_bytes=vmem_limit),
        cost_estimate=cost,
    )(x_flat, pool_all, w_stack, shift_stack, up_all)


def pyramid_pooling(x, params, pool_sizes, compute_dtype=jnp.bfloat16):
    """x: (N, C, H, W) float32. Returns cat(x, out1..out4) on channels:
    (N, C + 4*Cout, H, W) with Cout = C // len(pool_sizes)."""
    N, C, H, W = x.shape
    HW = H * W
    pool_all, w_stack, shift_stack, up_all, HWp, PPp, K = build_fused_operands(
        params, pool_sizes, H, W, compute_dtype)

    x_flat = x.reshape(N, C, HW).astype(compute_dtype)
    if HWp != HW:
        x_flat = jnp.pad(x_flat, ((0, 0), (0, 0), (0, HWp - HW)))

    tc = _pick_tile(C)   # contraction tile (multiple of 128 or full C)
    tk = _pick_tile(K)   # output-channel tile
    grid = (N, K // tk, C // tc)

    def run(single_buffer_consts):
        out = _pyramid_call(x_flat, pool_all, w_stack, shift_stack, up_all,
                            grid=grid, tc=tc, tk=tk, N=N, K=K, C=C,
                            HWp=HWp, PPp=PPp,
                            single_buffer_consts=single_buffer_consts)
        return jax.block_until_ready(out)

    try:
        branches_flat = run(True)      # single-buffered grid-invariant operands
    except Exception:                  # fallback for jax versions w/o Buffered(1)
        branches_flat = run(False)

    branches = branches_flat[:, :, :HW].reshape(N, K, H, W).astype(x.dtype)
    # Identity pass-through stays outside the kernel (exact f32, no extra HBM
    # traffic through the compute pipeline).
    return jnp.concatenate([x, branches], axis=1)


# ----------------------------------------------------------------------------
# Deterministic parameter init + pure-NumPy reference + demo run.
# ----------------------------------------------------------------------------
def init_params(key, in_c, pool_sizes):
    out_c = in_c // len(pool_sizes)
    eps = 1e-5
    params = []
    for _ in pool_sizes:
        key, k1, k2, k3 = jax.random.split(key, 4)
        w = jax.random.normal(k1, (out_c, in_c), jnp.float32) * 0.1
        gamma = jax.random.uniform(k2, (out_c,), jnp.float32, 0.5, 1.5)
        beta = jax.random.normal(k3, (out_c,), jnp.float32) * 0.1
        running_mean = jnp.zeros((out_c,), jnp.float32)
        running_var = jnp.ones((out_c,), jnp.float32)
        scale = gamma / jnp.sqrt(running_var + eps)
        shift = beta - running_mean * scale
        params.append((w, scale, shift))
    return params, key


def reference_pyramid_pooling(x, params, pool_sizes):
    """Pure NumPy float64 reference (eval-mode BN)."""
    N, C, H, W = x.shape
    xf = x.reshape(N, C, H * W).astype(np.float64)
    outs = [x.astype(np.float64)]
    for p, (w, scale, shift) in zip(pool_sizes, params):
        pm = np.kron(adaptive_pool_matrix(p, H),
                     adaptive_pool_matrix(p, W)).astype(np.float64)
        um = np.kron(bilinear_matrix(H, p),
                     bilinear_matrix(W, p)).astype(np.float64)
        wf = (np.asarray(scale)[:, None] * np.asarray(w)).astype(np.float64)
        b = np.asarray(shift).astype(np.float64)
        pooled = np.einsum('nck,pk->ncp', xf, pm)
        y = np.maximum(np.einsum('oc,ncp->nop', wf, pooled) + b[None, :, None], 0.0)
        o = np.einsum('nop,kp->nok', y, um)
        outs.append(o.reshape(N, -1, H, W))
    return np.concatenate(outs, axis=1)


if __name__ == "__main__":
    # Small but representative: exercises multi-tile K and C accumulation
    # (tc=tk=128 -> grid=(2, 2, 2)) while staying far below PSPNet's C=2048.
    N, C, H, W = 2, 256, 16, 16
    pool_sizes = [6, 3, 2, 1]   # PSPNet: PyramidPooling(in_c, [6, 3, 2, 1])

    key = jax.random.PRNGKey(0)
    params, key = init_params(key, C, pool_sizes)
    key, kx = jax.random.split(key)
    x = jax.random.normal(kx, (N, C, H, W), jnp.float32)

    out = pyramid_pooling(x, params, pool_sizes)
    out = jax.block_until_ready(out)

    expected_channels = C + len(pool_sizes) * (C // len(pool_sizes))  # 2*C
    assert out.shape == (N, expected_channels, H, W), out.shape
    assert bool(jnp.all(jnp.isfinite(out)))

    # Numerical sanity check vs float64 NumPy reference (bf16 operand tolerance).
    ref = reference_pyramid_pooling(np.asarray(x), params, pool_sizes)
    out_np = np.asarray(out, dtype=np.float64)
    err = np.abs(out_np - ref)
    max_rel = float(np.max(err / np.maximum(np.abs(ref), 1.0)))
    assert max_rel < 7.5e-2, (float(np.max(err)), max_rel)

    print("KERNEL_OK")
</pallas_src>

<mosaic_0001>
module attributes {stable_mosaic.version = 11 : i64} {
  func.func @pyramid_kernel(%arg0: i32, %arg1: i32, %arg2: i32, %arg3: memref<1x128x256xbf16, #tpu.memory_space<vmem>>, %arg4: memref<256x128xbf16, #tpu.memory_space<vmem>>, %arg5: memref<128x128xbf16, #tpu.memory_space<vmem>>, %arg6: memref<128x128xf32, #tpu.memory_space<vmem>>, %arg7: memref<128x256xbf16, #tpu.memory_space<vmem>>, %arg8: memref<1x128x256xf32, #tpu.memory_space<vmem>>, %arg9: memref<128x128xf32, #tpu.memory_space<vmem>>) attributes {dimension_semantics = [#tpu.dimension_semantics<parallel>, #tpu.dimension_semantics<parallel>, #tpu.dimension_semantics<arbitrary>], iteration_bounds = array<i64: 2, 2, 2>, scalar_prefetch = 0 : i64, scratch_operands = 1 : i64, tpu.core_type = #tpu.core_type<tc>, window_params = [{transform_indices = @transform_0, window_bounds = array<i64: 1, 128, 256>}, {pipeline_mode = #tpu.pipeline_mode<synchronous>, transform_indices = @transform_1, window_bounds = array<i64: 256, 128>}, {transform_indices = @transform_2, window_bounds = array<i64: 128, 128>}, {transform_indices = @transform_3, window_bounds = array<i64: 128, 128>}, {pipeline_mode = #tpu.pipeline_mode<synchronous>, transform_indices = @transform_4, window_bounds = array<i64: 128, 256>}, {transform_indices = @transform_5, window_bounds = array<i64: 1, 128, 256>}]} {
    %c0_i32 = arith.constant 0 : i32
    %0 = arith.cmpi eq, %arg2, %c0_i32 : i32
    %1 = arith.extui %0 : i1 to i32
    %c0_i32_0 = arith.constant 0 : i32
    %2 = arith.cmpi ne, %1, %c0_i32_0 : i32
    scf.if %2 {
      %cst_13 = arith.constant 0.000000e+00 : f32
      %16 = vector.broadcast %cst_13 : f32 to vector<128x128xf32>
      %c0_14 = arith.constant 0 : index
      %c0_15 = arith.constant 0 : index
      %17 = vector.load %arg9[%c0_14, %c0_15] : memref<128x128xf32, #tpu.memory_space<vmem>>, vector<128x128xf32>
      tpu.vector_store %arg9[%c0_14, %c0_15], %16 {strides = array<i32>} : memref<128x128xf32, #tpu.memory_space<vmem>>, vector<128x128xf32>,
    } else {
    }
    %c0 = arith.constant 0 : index
    %c0_1 = arith.constant 0 : index
    %c0_2 = arith.constant 0 : index
    %3 = vector.load %arg3[%c0, %c0_1, %c0_2] : memref<1x128x256xbf16, #tpu.memory_space<vmem>>, vector<1x128x256xbf16>
    %4 = vector.shape_cast %3 : vector<1x128x256xbf16> to vector<128x256xbf16>
    %c0_3 = arith.constant 0 : index
    %c0_4 = arith.constant 0 : index
    %5 = vector.load %arg4[%c0_3, %c0_4] : memref<256x128xbf16, #tpu.memory_space<vmem>>, vector<256x128xbf16>
    %cst = arith.constant dense<0.000000e+00> : vector<128x128xf32>
    %6 = tpu.matmul %4, %5, %cst {dimension_numbers = #tpu.dot_dimension_numbers<[1], [0], [0], [1], [0, 0, 1, 1], [], []>} : vector<128x256xbf16>, vector<256x128xbf16>, vector<128x128xf32> -> vector<128x128xf32>
    %c0_5 = arith.constant 0 : index
    %c0_6 = arith.constant 0 : index
    %7 = vector.load %arg9[%c0_5, %c0_6] : memref<128x128xf32, #tpu.memory_space<vmem>>, vector<128x128xf32>
    %c0_7 = arith.constant 0 : index
    %c0_8 = arith.constant 0 : index
    %8 = vector.load %arg5[%c0_7, %c0_8] : memref<128x128xbf16, #tpu.memory_space<vmem>>, vector<128x128xbf16>
    %9 = arith.truncf %6 : vector<128x128xf32> to vector<128x128xbf16>
    %cst_9 = arith.constant dense<0.000000e+00> : vector<128x128xf32>
    %10 = tpu.matmul %8, %9, %cst_9 {dimension_numbers = #tpu.dot_dimension_numbers<[1], [0], [0], [1], [0, 0, 1, 1], [], []>} : vector<128x128xbf16>, vector<128x128xbf16>, vector<128x128xf32> -> vector<128x128xf32>
    %11 = arith.addf %7, %10 : vector<128x128xf32>
    %c0_10 = arith.constant 0 : index
    %c0_11 = arith.constant 0 : index
    %12 = vector.load %arg9[%c0_10, %c0_11] : memref<128x128xf32, #tpu.memory_space<vmem>>, vector<128x128xf32>
    tpu.vector_store %arg9[%c0_10, %c0_11], %11 {strides = array<i32>} : memref<128x128xf32, #tpu.memory_space<vmem>>, vector<128x128xf32>,
    %c1_i32 = arith.constant 1 : i32
    %13 = arith.cmpi eq, %arg2, %c1_i32 : i32
    %14 = arith.extui %13 : i1 to i32
    %c0_i32_12 = arith.constant 0 : i32
    %15 = arith.cmpi ne, %14, %c0_i32_12 : i32
    scf.if %15 {
      %c0_13 = arith.constant 0 : index
      %c0_14 = arith.constant 0 : index
      %16 = vector.load %arg9[%c0_13, %c0_14] : memref<128x128xf32, #tpu.memory_space<vmem>>, vector<128x128xf32>
      %c0_15 = arith.constant 0 : index
      %c0_16 = arith.constant 0 : index
      %17 = vector.load %arg6[%c0_15, %c0_16] : memref<128x128xf32, #tpu.memory_space<vmem>>, vector<128x128xf32>
      %18 = arith.addf %16, %17 : vector<128x128xf32>
      %cst_17 = arith.constant 0.000000e+00 : f32
      %19 = vector.broadcast %cst_17 : f32 to vector<128x128xf32>
      %20 = arith.maximumf %18, %19 : vector<128x128xf32>
      %21 = arith.truncf %20 : vector<128x128xf32> to vector<128x128xbf16>
      %c0_18 = arith.constant 0 : index
      %c0_19 = arith.constant 0 : index
      %22 = vector.load %arg7[%c0_18, %c0_19] : memref<128x256xbf16, #tpu.memory_space<vmem>>, vector<128x256xbf16>
      %cst_20 = arith.constant dense<0.000000e+00> : vector<128x256xf32>
      %23 = tpu.matmul %21, %22, %cst_20 {dimension_numbers = #tpu.dot_dimension_numbers<[1], [0], [0], [1], [0, 0, 1, 1], [], []>} : vector<128x128xbf16>, vector<128x256xbf16>, vector<128x256xf32> -> vector<128x256xf32>
      %c0_21 = arith.constant 0 : index
      %c0_22 = arith.constant 0 : index
      %c0_23 = arith.constant 0 : index
      %24 = vector.load %arg8[%c0_21, %c0_22, %c0_23] : memref<1x128x256xf32, #tpu.memory_space<vmem>>, vector<1x128x256xf32>
      %25 = vector.shape_cast %24 : vector<1x128x256xf32> to vector<128x256xf32>
      %26 = vector.shape_cast %23 : vector<128x256xf32> to vector<1x128x256xf32>
      tpu.vector_store %arg8[%c0_21, %c0_22, %c0_23], %26 {strides = array<i32>} : memref<1x128x256xf32, #tpu.memory_space<vmem>>, vector<1x128x256xf32>,
    } else {
    }
    return
  }
  func.func @transform_0(%arg0: i32, %arg1: i32, %arg2: i32) -> (i32, i32, i32) {
    %c0_i32 = arith.constant 0 : i32
    %c0_i32_0 = arith.constant 0 : i32
    return %arg0, %arg2, %c0_i32 : i32, i32, i32
  }
  func.func @transform_1(%arg0: i32, %arg1: i32, %arg2: i32) -> (i32, i32) {
    %c0_i32 = arith.constant 0 : i32
    %c0_i32_0 = arith.constant 0 : i32
    %c0_i32_1 = arith.constant 0 : i32
    return %c0_i32, %c0_i32_0 : i32, i32
  }
  func.func @transform_2(%arg0: i32, %arg1: i32, %arg2: i32) -> (i32, i32) {
    %c0_i32 = arith.constant 0 : i32
    return %arg1, %arg2 : i32, i32
  }
  func.func @transform_3(%arg0: i32, %arg1: i32, %arg2: i32) -> (i32, i32) {
    %c0_i32 = arith.constant 0 : i32
    %c0_i32_0 = arith.constant 0 : i32
    return %arg1, %c0_i32 : i32, i32
  }
  func.func @transform_4(%arg0: i32, %arg1: i32, %arg2: i32) -> (i32, i32) {
    %c0_i32 = arith.constant 0 : i32
    %c0_i32_0 = arith.constant 0 : i32
    %c0_i32_1 = arith.constant 0 : i32
    return %c0_i32, %c0_i32_0 : i32, i32
  }
  func.func @transform_5(%arg0: i32, %arg1: i32, %arg2: i32) -> (i32, i32, i32) {
    %c0_i32 = arith.constant 0 : i32
    %c0_i32_0 = arith.constant 0 : i32
    return %arg0, %arg1, %c0_i32 : i32, i32, i32
  }
}

module attributes {stable_mosaic.version = 11 : i64} {
  func.func @pyramid_kernel(%arg0: i32, %arg1: i32, %arg2: i32, %arg3: memref<1x128x256xbf16, #tpu.memory_space<vmem>>, %arg4: memref<256x128xbf16, #tpu.memory_space<vmem>>, %arg5: memref<128x128xbf16, #tpu.memory_space<vmem>>, %arg6: memref<128x128xf32, #tpu.memory_space<vmem>>, %arg7: memref<128x256xbf16, #tpu.memory_space<vmem>>, %arg8: memref<1x128x256xf32, #tpu.memory_space<vmem>>, %arg9: memref<128x128xf32, #tpu.memory_space<vmem>>) attributes {dimension_semantics = [#tpu.dimension_semantics<parallel>, #tpu.dimension_semantics<parallel>, #tpu.dimension_semantics<arbitrary>], iteration_bounds = array<i64: 2, 2, 2>, scalar_prefetch = 0 : i64, scratch_operands = 1 : i64, tpu.core_type = #tpu.core_type<tc>, window_params = [{transform_indices = @transform_0, window_bounds = array<i64: 1, 128, 256>}, {pipeline_mode = #tpu.pipeline_mode<synchronous>, transform_indices = @transform_1, window_bounds = array<i64: 256, 128>}, {transform_indices = @transform_2, window_bounds = array<i64: 128, 128>}, {transform_indices = @transform_3, window_bounds = array<i64: 128, 128>}, {pipeline_mode = #tpu.pipeline_mode<synchronous>, transform_indices = @transform_4, window_bounds = array<i64: 128, 256>}, {transform_indices = @transform_5, window_bounds = array<i64: 1, 128, 256>}]} {
    %c0_i32 = arith.constant 0 : i32
    %0 = arith.cmpi eq, %arg2, %c0_i32 : i32
    %1 = arith.extui %0 : i1 to i32
    %c0_i32_0 = arith.constant 0 : i32
    %2 = arith.cmpi ne, %1, %c0_i32_0 : i32
    scf.if %2 {
      %cst_13 = arith.constant 0.000000e+00 : f32
      %16 = vector.broadcast %cst_13 : f32 to vector<128x128xf32>
      %c0_14 = arith.constant 0 : index
      %c0_15 = arith.constant 0 : index
      %17 = vector.load %arg9[%c0_14, %c0_15] : memref<128x128xf32, #tpu.memory_space<vmem>>, vector<128x128xf32>
      tpu.vector_store %arg9[%c0_14, %c0_15], %16 {strides = array<i32>} : memref<128x128xf32, #tpu.memory_space<vmem>>, vector<128x128xf32>,
    } else {
    }
    %c0 = arith.constant 0 : index
    %c0_1 = arith.constant 0 : index
    %c0_2 = arith.constant 0 : index
    %3 = vector.load %arg3[%c0, %c0_1, %c0_2] : memref<1x128x256xbf16, #tpu.memory_space<vmem>>, vector<1x128x256xbf16>
    %4 = vector.shape_cast %3 : vector<1x128x256xbf16> to vector<128x256xbf16>
    %c0_3 = arith.constant 0 : index
    %c0_4 = arith.constant 0 : index
    %5 = vector.load %arg4[%c0_3, %c0_4] : memref<256x128xbf16, #tpu.memory_space<vmem>>, vector<256x128xbf16>
    %cst = arith.constant dense<0.000000e+00> : vector<128x128xf32>
    %6 = tpu.matmul %4, %5, %cst {dimension_numbers = #tpu.dot_dimension_numbers<[1], [0], [0], [1], [0, 0, 1, 1], [], []>} : vector<128x256xbf16>, vector<256x128xbf16>, vector<128x128xf32> -> vector<128x128xf32>
    %c0_5 = arith.constant 0 : index
    %c0_6 = arith.constant 0 : index
    %7 = vector.load %arg9[%c0_5, %c0_6] : memref<128x128xf32, #tpu.memory_space<vmem>>, vector<128x128xf32>
    %c0_7 = arith.constant 0 : index
    %c0_8 = arith.constant 0 : index
    %8 = vector.load %arg5[%c0_7, %c0_8] : memref<128x128xbf16, #tpu.memory_space<vmem>>, vector<128x128xbf16>
    %9 = arith.truncf %6 : vector<128x128xf32> to vector<128x128xbf16>
    %cst_9 = arith.constant dense<0.000000e+00> : vector<128x128xf32>
    %10 = tpu.matmul %8, %9, %cst_9 {dimension_numbers = #tpu.dot_dimension_numbers<[1], [0], [0], [1], [0, 0, 1, 1], [], []>} : vector<128x128xbf16>, vector<128x128xbf16>, vector<128x128xf32> -> vector<128x128xf32>
    %11 = arith.addf %7, %10 : vector<128x128xf32>
    %c0_10 = arith.constant 0 : index
    %c0_11 = arith.constant 0 : index
    %12 = vector.load %arg9[%c0_10, %c0_11] : memref<128x128xf32, #tpu.memory_space<vmem>>, vector<128x128xf32>
    tpu.vector_store %arg9[%c0_10, %c0_11], %11 {strides = array<i32>} : memref<128x128xf32, #tpu.memory_space<vmem>>, vector<128x128xf32>,
    %c1_i32 = arith.constant 1 : i32
    %13 = arith.cmpi eq, %arg2, %c1_i32 : i32
    %14 = arith.extui %13 : i1 to i32
    %c0_i32_12 = arith.constant 0 : i32
    %15 = arith.cmpi ne, %14, %c0_i32_12 : i32
    scf.if %15 {
      %c0_13 = arith.constant 0 : index
      %c0_14 = arith.constant 0 : index
      %16 = vector.load %arg9[%c0_13, %c0_14] : memref<128x128xf32, #tpu.memory_space<vmem>>, vector<128x128xf32>
      %c0_15 = arith.constant 0 : index
      %c0_16 = arith.constant 0 : index
      %17 = vector.load %arg6[%c0_15, %c0_16] : memref<128x128xf32, #tpu.memory_space<vmem>>, vector<128x128xf32>
      %18 = arith.addf %16, %17 : vector<128x128xf32>
      %cst_17 = arith.constant 0.000000e+00 : f32
      %19 = vector.broadcast %cst_17 : f32 to vector<128x128xf32>
      %20 = arith.maximumf %18, %19 : vector<128x128xf32>
      %21 = arith.truncf %20 : vector<128x128xf32> to vector<128x128xbf16>
      %c0_18 = arith.constant 0 : index
      %c0_19 = arith.constant 0 : index
      %22 = vector.load %arg7[%c0_18, %c0_19] : memref<128x256xbf16, #tpu.memory_space<vmem>>, vector<128x256xbf16>
      %cst_20 = arith.constant dense<0.000000e+00> : vector<128x256xf32>
      %23 = tpu.matmul %21, %22, %cst_20 {dimension_numbers = #tpu.dot_dimension_numbers<[1], [0], [0], [1], [0, 0, 1, 1], [], []>} : vector<128x128xbf16>, vector<128x256xbf16>, vector<128x256xf32> -> vector<128x256xf32>
      %c0_21 = arith.constant 0 : index
      %c0_22 = arith.constant 0 : index
      %c0_23 = arith.constant 0 : index
      %24 = vector.load %arg8[%c0_21, %c0_22, %c0_23] : memref<1x128x256xf32, #tpu.memory_space<vmem>>, vector<1x128x256xf32>
      %25 = vector.shape_cast %24 : vector<1x128x256xf32> to vector<128x256xf32>
      %26 = vector.shape_cast %23 : vector<128x256xf32> to vector<1x128x256xf32>
      tpu.vector_store %arg8[%c0_21, %c0_22, %c0_23], %26 {strides = array<i32>} : memref<1x128x256xf32, #tpu.memory_space<vmem>>, vector<1x128x256xf32>,
    } else {
    }
    return
  }
  func.func @transform_0(%arg0: i32, %arg1: i32, %arg2: i32) -> (i32, i32, i32) {
    %c0_i32 = arith.constant 0 : i32
    %c0_i32_0 = arith.constant 0 : i32
    return %arg0, %arg2, %c0_i32 : i32, i32, i32
  }
  func.func @transform_1(%arg0: i32, %arg1: i32, %arg2: i32) -> (i32, i32) {
    %c0_i32 = arith.constant 0 : i32
    %c0_i32_0 = arith.constant 0 : i32
    %c0_i32_1 = arith.constant 0 : i32
    return %c0_i32, %c0_i32_0 : i32, i32
  }
  func.func @transform_2(%arg0: i32, %arg1: i32, %arg2: i32) -> (i32, i32) {
    %c0_i32 = arith.constant 0 : i32
    return %arg1, %arg2 : i32, i32
  }
  func.func @transform_3(%arg0: i32, %arg1: i32, %arg2: i32) -> (i32, i32) {
    %c0_i32 = arith.constant 0 : i32
    %c0_i32_0 = arith.constant 0 : i32
    return %arg1, %c0_i32 : i32, i32
  }
  func.func @transform_4(%arg0: i32, %arg1: i32, %arg2: i32) -> (i32, i32) {
    %c0_i32 = arith.constant 0 : i32
    %c0_i32_0 = arith.constant 0 : i32
    %c0_i32_1 = arith.constant 0 : i32
    return %c0_i32, %c0_i32_0 : i32, i32
  }
  func.func @transform_5(%arg0: i32, %arg1: i32, %arg2: i32) -> (i32, i32, i32) {
    %c0_i32 = arith.constant 0 : i32
    %c0_i32_0 = arith.constant 0 : i32
    return %arg0, %arg1, %c0_i32 : i32, i32, i32
  }
}

</mosaic_0001>

<llo_original>
// kernel: tpu_custom_call.1
$region0: #{tpu_custom_call.1}
  #allocation0 [shape = 'u32[]', space=smem, size = 0x4, offset = 0x4, fixed_abs, tag = 'smem constant byte address 0x4 - core index']
  #allocation1 [shape = 'u32[144,128]{1,0:T(1,128)}', space=vmem, size = 0x12000, scoped, tag = 'internal scratch']
  #allocation2 [shape = 'f32[128,128]{1,0:T(8,128)}', space=vmem, size = 0x10000, scoped, tag = 'scratch operand']
  %s0 = inlined_call_operand.hbm [shape: bf16[2,256,256], index: 0, kind: input, shape index: {}]
  %s1 = inlined_call_operand.hbm [shape: bf16[256,128], index: 1, kind: input, shape index: {}]
  %s2 = inlined_call_operand.hbm [shape: bf16[256,256], index: 2, kind: input, shape index: {}]
  %s3 = inlined_call_operand.hbm [shape: f32[256,128], index: 3, kind: input, shape index: {}]
  %s4 = inlined_call_operand.hbm [shape: bf16[128,256], index: 4, kind: input, shape index: {}]
  %s5 = inlined_call_operand.hbm [shape: f32[2,256,256], index: 5, kind: output, shape index: {}]
  %s6 = sld [smem:[#allocation0]]
  $region81: #{tpu_custom_call.1} parent=0
    _
  %s8 = ssub.s32 1, %s6
  %s9 = scalar_select 0, %s8, %s6
  $region1: #{tpu_custom_call.1} parent=0
    #allocation3 [shape = 'u8[131072]{0}', space=vmem, size = 0x20000, scoped, tag = 'input window, operand 0']
    #allocation4 [shape = 's32[2]{0}', space=sflag, size = 0x8, scoped, tag = 'scoped memory for tpu_custom_call.1']
    #allocation5 [shape = 's32[2]{0}', space=sflag, size = 0x8, scoped, tag = 'scoped memory for tpu_custom_call.1']
    #allocation6 [shape = 'u8[65536]{0}', space=vmem, size = 0x10000, scoped, tag = 'input window, operand 1, single buffered']
    #allocation7 [shape = 's32[1]{0}', space=sflag, size = 0x4, scoped, tag = 'scoped memory for tpu_custom_call.1']
    #allocation8 [shape = 'u8[65536]{0}', space=vmem, size = 0x10000, scoped, tag = 'input window, operand 2']
    #allocation9 [shape = 'u8[131072]{0}', space=vmem, size = 0x20000, scoped, tag = 'input window, operand 3']
    #allocation10 [shape = 'u8[65536]{0}', space=vmem, size = 0x10000, scoped, tag = 'input window, operand 4, single buffered']
    #allocation11 [shape = 'u8[262144]{0}', space=vmem, size = 0x40000, scoped, tag = 'output window, operand 0']
    %10 = vsyncpa [#allocation4], 0
    %s11 = scalar_lea.sflag [#allocation4], 1
    %12 = vsyncpa %s11, 0
    %13 = vsyncpa [#allocation7], 0
    %14 = vsyncpa [#allocation5], 0
    %s15 = scalar_lea.sflag [#allocation5], 1
    %16 = vsyncpa %s15, 0
    loop: start=0, step=1, limit=10
    $region2: #{tpu_custom_call.1} parent=1 // loop_pre_header
      _
    $region3: #{tpu_custom_call.1} parent=1 // loop_header
      %s18 = sphi 0, %s22
      %p19 = scmp.ge.s32.totalorder %s18, 10
      %s25 = sphi 0, %s44
      %s26 = sphi 0, %s40
      %s27 = sphi 0, %s36
      %s28 = sphi 0, %s25
      %s29 = sphi 0, %s26
      %s30 = sphi 0, %s27
      %s31 = sphi 0, %s28
      %s32 = sphi 0, %s29
      %s33 = sphi 0, %s30
      %s49 = sphi 0, %s51
      %s52 = sphi 0, %s49
      %s53 = sphi 0, %s52
      %s69 = sphi 0, %s53
      %s73 = sphi 0, %s73
      %s75 = sphi 0, %s73
      %s76 = sphi 0, %s75
      %s90 = sphi 0, %s76
      %s98 = sphi 0, %s100
      %s101 = sphi 0, %s98
      %s102 = sphi 0, %s101
      %s118 = sphi 0, %s102
      %s124 = sphi 0, %s126
      %s127 = sphi 0, %s124
      %s128 = sphi 0, %s127
      %s144 = sphi 0, %s128
      %s148 = sphi 0, %s148
      %s150 = sphi 0, %s148
      %s151 = sphi 0, %s150
      %s165 = sphi 0, %s151
      %s173 = sphi 0, %s175
      %s176 = sphi 0, %s173
      %s177 = sphi 0, %s176
      %s193 = sphi 0, %s177
    $region4: #{tpu_custom_call.1} parent=1 // loop_header_branch
      %21 = sbr.rel (%p19) target = $region8
    $region5: #{tpu_custom_call.1} parent=1 // loop_body
      %s23 = ssub.s32 %s18, 1
      %s24 = ssub.s32 %s18, 2
      %s34 = sadd.s32 1, %s27
      %p35 = scmp.ge.s32.totalorder %s34, 2
      %s36 = scalar_select %p35, 0, %s34
      %s37 = sadd.s32 1, %s26
      %s38 = scalar_select %p35, %s37, %s26
      %p39 = scmp.ge.s32.totalorder %s38, 2
      %s40 = scalar_select %p39, 0, %s38
      %s41 = sadd.s32 1, %s25
      %s42 = scalar_select %p39, %s41, %s25
      %p43 = scmp.ge.s32.totalorder %s42, 2
      %s44 = scalar_select %p43, 0, %s42
      %s45 = ssub.s32 %s25, %s44
      %s46 = ssub.s32 %s27, %s36
      %s47 = sor.u32 %s45, %s46
      %p48 = scmp.eq.s32.totalorder %s47, 0
      %s50 = sadd.s32 %s49, 1
      %s51 = scalar_select %p48, %s49, %s50
      %p54 = pneg %p48
      %p55 = scmp.eq.s32.totalorder %s18, 7
      %p56 = por %p54, %p55
      %p57 = scmp.ne.s32.totalorder %s49, %s52
      %p58 = scmp.eq.s32.totalorder %s18, 0
      %p59 = por %p57, %p58
      %p60 = scmp.ne.s32.totalorder %s49, %s52
      %p61 = scmp.eq.s32.totalorder %s23, 7
      %p62 = por %p60, %p61
      %p63 = scmp.ne.s32.totalorder %s52, %s53
      %p64 = scmp.eq.s32.totalorder %s23, 0
      %p65 = por %p63, %p64
      %p66 = scmp.ne.s32.totalorder %s52, %s53
      %p67 = scmp.eq.s32.totalorder %s24, 7
      %p68 = por %p66, %p67
      %p70 = scmp.ne.s32.totalorder %s53, %s69
      %p71 = scmp.eq.s32.totalorder %s24, 0
      %p72 = por %p70, %p71
      %s74 = sadd.s32 %s73, 1
      %p77 = scmp.eq.s32.totalorder %s18, 7
      %p78 = scmp.ne.s32.totalorder %s73, %s75
      %p79 = scmp.eq.s32.totalorder %s18, 0
      %p80 = por %p78, %p79
      %p81 = scmp.ne.s32.totalorder %s73, %s75
      %p82 = scmp.eq.s32.totalorder %s23, 7
      %p83 = por %p81, %p82
      %p84 = scmp.ne.s32.totalorder %s75, %s76
      %p85 = scmp.eq.s32.totalorder %s23, 0
      %p86 = por %p84, %p85
      %p87 = scmp.ne.s32.totalorder %s75, %s76
      %p88 = scmp.eq.s32.totalorder %s24, 7
      %p89 = por %p87, %p88
      %p91 = scmp.ne.s32.totalorder %s76, %s90
      %p92 = scmp.eq.s32.totalorder %s24, 0
      %p93 = por %p91, %p92
      %s94 = ssub.s32 %s26, %s40
      %s95 = ssub.s32 %s27, %s36
      %s96 = sor.u32 %s94, %s95
      %p97 = scmp.eq.s32.totalorder %s96, 0
      %s99 = sadd.s32 %s98, 1
      %s100 = scalar_select %p97, %s98, %s99
      %p103 = pneg %p97
      %p104 = scmp.eq.s32.totalorder %s18, 7
      %p105 = por %p103, %p104
      %p106 = scmp.ne.s32.totalorder %s98, %s101
      %p107 = scmp.eq.s32.totalorder %s18, 0
      %p108 = por %p106, %p107
      %p109 = scmp.ne.s32.totalorder %s98, %s101
      %p110 = scmp.eq.s32.totalorder %s23, 7
      %p111 = por %p109, %p110
      %p112 = scmp.ne.s32.totalorder %s101, %s102
      %p113 = scmp.eq.s32.totalorder %s23, 0
      %p114 = por %p112, %p113
      %p115 = scmp.ne.s32.totalorder %s101, %s102
      %p116 = scmp.eq.s32.totalorder %s24, 7
      %p117 = por %p115, %p116
      %p119 = scmp.ne.s32.totalorder %s102, %s118
      %p120 = scmp.eq.s32.totalorder %s24, 0
      %p121 = por %p119, %p120
      %s122 = ssub.s32 %s26, %s40
      %p123 = scmp.eq.s32.totalorder %s122, 0
      %s125 = sadd.s32 %s124, 1
      %s126 = scalar_select %p123, %s124, %s125
      %p129 = pneg %p123
      %p130 = scmp.eq.s32.totalorder %s18, 7
      %p131 = por %p129, %p130
      %p132 = scmp.ne.s32.totalorder %s124, %s127
      %p133 = scmp.eq.s32.totalorder %s18, 0
      %p134 = por %p132, %p133
      %p135 = scmp.ne.s32.totalorder %s124, %s127
      %p136 = scmp.eq.s32.totalorder %s23, 7
      %p137 = por %p135, %p136
      %p138 = scmp.ne.s32.totalorder %s127, %s128
      %p139 = scmp.eq.s32.totalorder %s23, 0
      %p140 = por %p138, %p139
      %p141 = scmp.ne.s32.totalorder %s127, %s128
      %p142 = scmp.eq.s32.totalorder %s24, 7
      %p143 = por %p141, %p142
      %p145 = scmp.ne.s32.totalorder %s128, %s144
      %p146 = scmp.eq.s32.totalorder %s24, 0
      %p147 = por %p145, %p146
      %s149 = sadd.s32 %s148, 1
      %p152 = scmp.eq.s32.totalorder %s18, 7
      %p153 = scmp.ne.s32.totalorder %s148, %s150
      %p154 = scmp.eq.s32.totalorder %s18, 0
      %p155 = por %p153, %p154
      %p156 = scmp.ne.s32.totalorder %s148, %s150
      %p157 = scmp.eq.s32.totalorder %s23, 7
      %p158 = por %p156, %p157
      %p159 = scmp.ne.s32.totalorder %s150, %s151
      %p160 = scmp.eq.s32.totalorder %s23, 0
      %p161 = por %p159, %p160
      %p162 = scmp.ne.s32.totalorder %s150, %s151
      %p163 = scmp.eq.s32.totalorder %s24, 7
      %p164 = por %p162, %p163
      %p166 = scmp.ne.s32.totalorder %s151, %s165
      %p167 = scmp.eq.s32.totalorder %s24, 0
      %p168 = por %p166, %p167
      %s169 = ssub.s32 %s25, %s44
      %s170 = ssub.s32 %s26, %s40
      %s171 = sor.u32 %s169, %s170
      %p172 = scmp.eq.s32.totalorder %s171, 0
      %s174 = sadd.s32 %s173, 1
      %s175 = scalar_select %p172, %s173, %s174
      %p178 = pneg %p172
      %p179 = scmp.eq.s32.totalorder %s18, 7
      %p180 = por %p178, %p179
      %p181 = scmp.ne.s32.totalorder %s173, %s176
      %p182 = scmp.eq.s32.totalorder %s18, 0
      %p183 = por %p181, %p182
      %p184 = scmp.ne.s32.totalorder %s173, %s176
      %p185 = scmp.eq.s32.totalorder %s23, 7
      %p186 = por %p184, %p185
      %p187 = scmp.ne.s32.totalorder %s176, %s177
      %p188 = scmp.eq.s32.totalorder %s23, 0
      %p189 = por %p187, %p188
      %p190 = scmp.ne.s32.totalorder %s176, %s177
      %p191 = scmp.eq.s32.totalorder %s24, 7
      %p192 = por %p190, %p191
      %p194 = scmp.ne.s32.totalorder %s177, %s193
      %p195 = scmp.eq.s32.totalorder %s24, 0
      %p196 = por %p194, %p195
      %p197 = scmp.le.s32.totalorder 1, %s18
      %p198 = scmp.lt.s32.totalorder %s18, 9
      %p199 = pnand %p197, %p198
      %p200 = pneg %p199
      // Predicated region
      $region9: #{tpu_custom_call.1} parent=5 // pred_check
        _
      $region10: #{tpu_custom_call.1} parent=5 // pred_check_branch
        %202 = sbr.rel (%p199) target = $region12
      $region11: #{tpu_custom_call.1} parent=5 // pred_region
        %s203 = ssub.s32 %s18, 1
        // Predicated region
        $region13: #{tpu_custom_call.1} parent=11 // pred_check
          %p204 = pneg %p86
        $region14: #{tpu_custom_call.1} parent=11 // pred_check_branch
          %206 = sbr.rel (%p204) target = $region16
        $region15: #{tpu_custom_call.1} parent=11 // pred_region
          %s208 = ssub.s32 2048, 2048
          %209 = vsyncadd [#allocation7], %s208
          %s210 = sshll.u32 [#allocation6], 4
          %s211 = int_to_ptr.vmem [resolvable:$true] %s210
          %216 = dma.hbm_to_vmem [thread:$0]  %s1, 2048, %s211, [#allocation7], 64, 64, 4
        $region16: #{tpu_custom_call.1} parent=11 // pred_fallthru
          _
        // Predicated region
        $region17: #{tpu_custom_call.1} parent=11 // pred_check
          %p217 = pneg %p161
        $region18: #{tpu_custom_call.1} parent=11 // pred_check_branch
          %219 = sbr.rel (%p217) target = $region20
        $region19: #{tpu_custom_call.1} parent=11 // pred_region
          %s221 = ssub.s32 2048, 2048
          %222 = vsyncadd [#allocation7], %s221
          %s223 = sshll.u32 [#allocation10], 4
          %s224 = int_to_ptr.vmem [resolvable:$true] %s223
          %229 = dma.hbm_to_vmem [thread:$0]  %s4, 2048, %s224, [#allocation7], 128, 128, 8
        $region20: #{tpu_custom_call.1} parent=11 // pred_fallthru
          _
      $region12: #{tpu_custom_call.1} parent=5 // pred_fallthru
        _
      %p230 = scmp.lt.s32.totalorder %s18, 8
      // Predicated region
      $region21: #{tpu_custom_call.1} parent=5 // pred_check
        %p231 = pneg %p230
      $region22: #{tpu_custom_call.1} parent=5 // pred_check_branch
        %233 = sbr.rel (%p231) target = $region24
      $region23: #{tpu_custom_call.1} parent=5 // pred_region
        // Predicated region
        $region25: #{tpu_custom_call.1} parent=23 // pred_check
          %p234 = pneg %p59
        $region26: #{tpu_custom_call.1} parent=23 // pred_check_branch
          %236 = sbr.rel (%p234) target = $region28
        $region27: #{tpu_custom_call.1} parent=23 // pred_region
          %s237 = sand.u32 %s18, 1
          %s238 = scalar_lea.sflag [#allocation4], %s237
          %s239 = sand.u32 %s49, 1
          %s240 = smul.addr %s239, 128
          %s241 = scalar_lea.vmem [#allocation3], %s240
          %s242 = smul.u32 16, %s27
          %s244 = ssub.s32 2048, 2048
          %245 = vsyncadd %s238, %s244
          %s246 = smul.addr %s242, 2
          %s247 = smul.addr %s25, 64
          %s248 = sadd.s32 %s246, %s247
          %s249 = smul.addr %s248, 64
          %s250 = scalar_lea.hbm %s0, %s249
          %s251 = sshll.u32 %s241, 4
          %s252 = int_to_ptr.vmem [resolvable:$true] %s251
          %257 = dma.hbm_to_vmem [thread:$0]  %s250, 2048, %s252, %s238, 128, 128, 8
        $region28: #{tpu_custom_call.1} parent=23 // pred_fallthru
          _
        // Predicated region
        $region29: #{tpu_custom_call.1} parent=23 // pred_check
          %p258 = pneg %p108
        $region30: #{tpu_custom_call.1} parent=23 // pred_check_branch
          %260 = sbr.rel (%p258) target = $region32
        $region31: #{tpu_custom_call.1} parent=23 // pred_region
          %s261 = sand.u32 %s18, 1
          %s262 = scalar_lea.sflag [#allocation4], %s261
          %s263 = sand.u32 %s98, 1
          %s264 = smul.addr %s263, 64
          %s265 = scalar_lea.vmem [#allocation8], %s264
          %s266 = smul.u32 16, %s26
          %s268 = ssub.s32 1024, 1024
          %269 = vsyncadd %s262, %s268
          %s270 = smul.addr %s266, 2
          %s271 = sadd.s32 %s27, %s270
          %s272 = smul.addr %s271, 64
          %s273 = scalar_lea.hbm %s2, %s272
          %s274 = sshll.u32 %s265, 4
          %s275 = int_to_ptr.vmem [resolvable:$true] %s274
          %280 = dma.hbm_to_vmem [thread:$0]  %s273, 1024, %s275, %s262, 128, 64, 4
        $region32: #{tpu_custom_call.1} parent=23 // pred_fallthru
          _
        // Predicated region
        $region33: #{tpu_custom_call.1} parent=23 // pred_check
          %p281 = pneg %p134
        $region34: #{tpu_custom_call.1} parent=23 // pred_check_branch
          %283 = sbr.rel (%p281) target = $region36
        $region35: #{tpu_custom_call.1} parent=23 // pred_region
          %s284 = sand.u32 %s18, 1
          %s285 = scalar_lea.sflag [#allocation4], %s284
          %s286 = sand.u32 %s124, 1
          %s287 = smul.addr %s286, 128
          %s288 = scalar_lea.vmem [#allocation9], %s287
          %s289 = smul.u32 16, %s26
          %s291 = ssub.s32 2048, 2048
          %292 = vsyncadd %s285, %s291
          %s293 = smul.addr %s289, 128
          %s294 = scalar_lea.hbm %s3, %s293
          %s295 = sshll.u32 %s288, 4
          %s296 = int_to_ptr.vmem [resolvable:$true] %s295
          %301 = dma.hbm_to_vmem [thread:$0]  %s294, 2048, %s296, %s285, 128, 128, 8
        $region36: #{tpu_custom_call.1} parent=23 // pred_fallthru
          _
      $region24: #{tpu_custom_call.1} parent=5 // pred_fallthru
        _
      %p302 = scmp.le.s32.totalorder 1, %s18
      %p303 = scmp.lt.s32.totalorder %s18, 9
      %p304 = pnand %p302, %p303
      %p305 = pneg %p304
      // Predicated region
      $region37: #{tpu_custom_call.1} parent=5 // pred_check
        _
      $region38: #{tpu_custom_call.1} parent=5 // pred_check_branch
        %307 = sbr.rel (%p304) target = $region40
      $region39: #{tpu_custom_call.1} parent=5 // pred_region
        %s308 = ssub.s32 %s18, 1
        %s309 = sand.u32 %s23, 1
        %s310 = scalar_lea.sflag [#allocation4], %s309
        %s311 = sand.u32 %s52, 1
        %s312 = smul.addr %s311, 128
        %s313 = scalar_lea.vmem [#allocation3], %s312
        // Predicated region
        $region41: #{tpu_custom_call.1} parent=39 // pred_check
          %p314 = pneg %p65
        $region42: #{tpu_custom_call.1} parent=39 // pred_check_branch
          %316 = sbr.rel (%p314) target = $region44
        $region43: #{tpu_custom_call.1} parent=39 // pred_region
          %317 = dma.done %s310, 2048
        $region44: #{tpu_custom_call.1} parent=39 // pred_fallthru
          _
        // Predicated region
        $region45: #{tpu_custom_call.1} parent=39 // pred_check
          %p318 = pneg %p86
        $region46: #{tpu_custom_call.1} parent=39 // pred_check_branch
          %320 = sbr.rel (%p318) target = $region48
        $region47: #{tpu_custom_call.1} parent=39 // pred_region
          %321 = dma.done [#allocation7], 2048
        $region48: #{tpu_custom_call.1} parent=39 // pred_fallthru
          _
        %s322 = sand.u32 %s23, 1
        %s323 = scalar_lea.sflag [#allocation4], %s322
        %s324 = sand.u32 %s101, 1
        %s325 = smul.addr %s324, 64
        %s326 = scalar_lea.vmem [#allocation8], %s325
        // Predicated region
        $region49: #{tpu_custom_call.1} parent=39 // pred_check
          %p327 = pneg %p114
        $region50: #{tpu_custom_call.1} parent=39 // pred_check_branch
          %329 = sbr.rel (%p327) target = $region52
        $region51: #{tpu_custom_call.1} parent=39 // pred_region
          %330 = dma.done %s323, 1024
        $region52: #{tpu_custom_call.1} parent=39 // pred_fallthru
          _
        %s331 = sand.u32 %s23, 1
        %s332 = scalar_lea.sflag [#allocation4], %s331
        %s333 = sand.u32 %s127, 1
        %s334 = smul.addr %s333, 128
        %s335 = scalar_lea.vmem [#allocation9], %s334
        // Predicated region
        $region53: #{tpu_custom_call.1} parent=39 // pred_check
          %p336 = pneg %p140
        $region54: #{tpu_custom_call.1} parent=39 // pred_check_branch
          %338 = sbr.rel (%p336) target = $region56
        $region55: #{tpu_custom_call.1} parent=39 // pred_region
          %339 = dma.done %s332, 2048
        $region56: #{tpu_custom_call.1} parent=39 // pred_fallthru
          _
        // Predicated region
        $region57: #{tpu_custom_call.1} parent=39 // pred_check
          %p340 = pneg %p161
        $region58: #{tpu_custom_call.1} parent=39 // pred_check_branch
          %342 = sbr.rel (%p340) target = $region60
        $region59: #{tpu_custom_call.1} parent=39 // pred_region
          %343 = dma.done [#allocation7], 2048
        $region60: #{tpu_custom_call.1} parent=39 // pred_fallthru
          _
        %s344 = sand.u32 %s23, 1
        %s345 = scalar_lea.sflag [#allocation4], %s344
        %s346 = sand.u32 %s52, 1
        %s347 = smul.addr %s346, 128
        %s348 = scalar_lea.vmem [#allocation3], %s347
        %p349 = pneg %p65
        %p350 = pneg %p62
        %p351 = pneg %p86
        %p352 = pneg %p83
        %s353 = sand.u32 %s23, 1
        %s354 = scalar_lea.sflag [#allocation4], %s353
        %s355 = sand.u32 %s101, 1
        %s356 = smul.addr %s355, 64
        %s357 = scalar_lea.vmem [#allocation8], %s356
        %p358 = pneg %p114
        %p359 = pneg %p111
        %s360 = sand.u32 %s23, 1
        %s361 = scalar_lea.sflag [#allocation4], %s360
        %s362 = sand.u32 %s127, 1
        %s363 = smul.addr %s362, 128
        %s364 = scalar_lea.vmem [#allocation9], %s363
        %p365 = pneg %p140
        %p366 = pneg %p137
        %p367 = pneg %p161
        %p368 = pneg %p158
        %p369 = pneg %p189
        %p370 = pneg %p186
        %s371 = sand.u32 %s176, 1
        %s372 = scalar_lea.sflag [#allocation5], %s371
        %s373 = sand.u32 %s176, 1
        %s374 = smul.addr %s373, 256
        %s375 = scalar_lea.vmem [#allocation11], %s374
        %s376 = smul.u32 16, %s30
        %s377 = smul.u32 16, %s29
        %s378 = smul.u32 16, %s29
        %s379 = smul.u32 16, %s29
        %p381 = scmp.eq.s32.totalorder %s30, 0
        // Predicated region
        $region61: #{tpu_custom_call.1} parent=39 // pred_check
          %p382 = pneg %p381
        $region62: #{tpu_custom_call.1} parent=39 // pred_check_branch
          %384 = sbr.rel (%p382) target = $region64
        $region63: #{tpu_custom_call.1} parent=39 // pred_region
          %385 = vst [vmem:[#allocation2] sm:$0xff] 0.0
          %386 = vst [vmem:[#allocation2 + $0x8] sm:$0xff] 0.0
          %387 = vst [vmem:[#allocation2 + $0x10] sm:$0xff] 0.0
          %388 = vst [vmem:[#allocation2 + $0x18] sm:$0xff] 0.0
          %389 = vst [vmem:[#allocation2 + $0x20] sm:$0xff] 0.0
          %390 = vst [vmem:[#allocation2 + $0x28] sm:$0xff] 0.0
          %391 = vst [vmem:[#allocation2 + $0x30] sm:$0xff] 0.0
          %392 = vst [vmem:[#allocation2 + $0x38] sm:$0xff] 0.0
          %393 = vst [vmem:[#allocation2 + $0x40] sm:$0xff] 0.0
          %394 = vst [vmem:[#allocation2 + $0x48] sm:$0xff] 0.0
          %395 = vst [vmem:[#allocation2 + $0x50] sm:$0xff] 0.0
          %396 = vst [vmem:[#allocation2 + $0x58] sm:$0xff] 0.0
          %397 = vst [vmem:[#allocation2 + $0x60] sm:$0xff] 0.0
          %398 = vst [vmem:[#allocation2 + $0x68] sm:$0xff] 0.0
          %399 = vst [vmem:[#allocation2 + $0x70] sm:$0xff] 0.0
          %400 = vst [vmem:[#allocation2 + $0x78] sm:$0xff] 0.0
        $region64: #{tpu_custom_call.1} parent=39 // pred_fallthru
          _
        %v401 = vld [vmem:[%s313] sm:$0xff]
        %v402 = vld [vmem:[%s313 + $0x8] sm:$0xff]
        %v403 = vld [vmem:[%s313 + $0x10] sm:$0xff]
        %v404 = vld [vmem:[%s313 + $0x18] sm:$0xff]
        %v405 = vld [vmem:[%s313 + $0x20] sm:$0xff]
        %v406 = vld [vmem:[%s313 + $0x28] sm:$0xff]
        %v407 = vld [vmem:[%s313 + $0x30] sm:$0xff]
        %v408 = vld [vmem:[%s313 + $0x38] sm:$0xff]
        %v409 = vld [vmem:[%s313 + $0x40] sm:$0xff]
        %v410 = vld [vmem:[%s313 + $0x48] sm:$0xff]
        %v411 = vld [vmem:[%s313 + $0x50] sm:$0xff]
        %v412 = vld [vmem:[%s313 + $0x58] sm:$0xff]
        %v413 = vld [vmem:[%s313 + $0x60] sm:$0xff]
        %v414 = vld [vmem:[%s313 + $0x68] sm:$0xff]
        %v415 = vld [vmem:[%s313 + $0x70] sm:$0xff]
        %v416 = vld [vmem:[%s313 + $0x78] sm:$0xff]
        %v417 = vld [vmem:[#allocation6] sm:$0xf]
        %v418 = vld [vmem:[#allocation6 + $0x4] sm:$0xf]
        %v419 = vld [vmem:[#allocation6 + $0x8] sm:$0xf]
        %v420 = vld [vmem:[#allocation6 + $0xc] sm:$0xf]
        %v421 = vld [vmem:[#allocation6 + $0x10] sm:$0xf]
        %v422 = vld [vmem:[#allocation6 + $0x14] sm:$0xf]
        %v423 = vld [vmem:[#allocation6 + $0x18] sm:$0xf]
        %v424 = vld [vmem:[#allocation6 + $0x1c] sm:$0xf]
        %v425 = vld [vmem:[#allocation6 + $0x20] sm:$0xf]
        %v426 = vld [vmem:[#allocation6 + $0x24] sm:$0xf]
        %v427 = vld [vmem:[#allocation6 + $0x28] sm:$0xf]
        %v428 = vld [vmem:[#allocation6 + $0x2c] sm:$0xf]
        %v429 = vld [vmem:[#allocation6 + $0x30] sm:$0xf]
        %v430 = vld [vmem:[#allocation6 + $0x34] sm:$0xf]
        %v431 = vld [vmem:[#allocation6 + $0x38] sm:$0xf]
        %v432 = vld [vmem:[#allocation6 + $0x3c] sm:$0xf]
        %v433 = vld [vmem:[#allocation6 + $0x40] sm:$0xf]
        %v434 = vld [vmem:[#allocation6 + $0x44] sm:$0xf]
        %v435 = vld [vmem:[#allocation6 + $0x48] sm:$0xf]
        %v436 = vld [vmem:[#allocation6 + $0x4c] sm:$0xf]
        %v437 = vld [vmem:[#allocation6 + $0x50] sm:$0xf]
        %v438 = vld [vmem:[#allocation6 + $0x54] sm:$0xf]
        %v439 = vld [vmem:[#allocation6 + $0x58] sm:$0xf]
        %v440 = vld [vmem:[#allocation6 + $0x5c] sm:$0xf]
        %v441 = vld [vmem:[#allocation6 + $0x60] sm:$0xf]
        %v442 = vld [vmem:[#allocation6 + $0x64] sm:$0xf]
        %v443 = vld [vmem:[#allocation6 + $0x68] sm:$0xf]
        %v444 = vld [vmem:[#allocation6 + $0x6c] sm:$0xf]
        %v445 = vld [vmem:[#allocation6 + $0x70] sm:$0xf]
        %v446 = vld [vmem:[#allocation6 + $0x74] sm:$0xf]
        %v447 = vld [vmem:[#allocation6 + $0x78] sm:$0xf]
        %v448 = vld [vmem:[#allocation6 + $0x7c] sm:$0xf]
        %v465 = vunpack.c.l.b16 %v401
        %v466 = vunpack.c.h.b16 %v401
        %v467 = vunpack.c.l.b16 %v402
        %v468 = vunpack.c.h.b16 %v402
        %v469 = vunpack.c.l.b16 %v403
        %v470 = vunpack.c.h.b16 %v403
        %v471 = vunpack.c.l.b16 %v404
        %v472 = vunpack.c.h.b16 %v404
        %v473 = vunpack.c.l.b16 %v405
        %v474 = vunpack.c.h.b16 %v405
        %v475 = vunpack.c.l.b16 %v406
        %v476 = vunpack.c.h.b16 %v406
        %v477 = vunpack.c.l.b16 %v407
        %v478 = vunpack.c.h.b16 %v407
        %v479 = vunpack.c.l.b16 %v408
        %v480 = vunpack.c.h.b16 %v408
        %v481 = vunpack.c.l.b16 %v409
        %v482 = vunpack.c.h.b16 %v409
        %v483 = vunpack.c.l.b16 %v410
        %v484 = vunpack.c.h.b16 %v410
        %v485 = vunpack.c.l.b16 %v411
        %v486 = vunpack.c.h.b16 %v411
        %v487 = vunpack.c.l.b16 %v412
        %v488 = vunpack.c.h.b16 %v412
        %v489 = vunpack.c.l.b16 %v413
        %v490 = vunpack.c.h.b16 %v413
        %v491 = vunpack.c.l.b16 %v414
        %v492 = vunpack.c.h.b16 %v414
        %v493 = vunpack.c.l.b16 %v415
        %v494 = vunpack.c.h.b16 %v415
        %v495 = vunpack.c.l.b16 %v416
        %v496 = vunpack.c.h.b16 %v416
        %v497 = vpack.c.b16 %v467, %v465
        %v498 = vpack.c.b16 %v468, %v466
        %v499 = vpack.c.b16 %v471, %v469
        %v500 = vpack.c.b16 %v472, %v470
        %v501 = vpack.c.b16 %v475, %v473
        %v502 = vpack.c.b16 %v476, %v474
        %v503 = vpack.c.b16 %v479, %v477
        %v504 = vpack.c.b16 %v480, %v478
        %v505 = vpack.c.b16 %v483, %v481
        %v506 = vpack.c.b16 %v484, %v482
        %v507 = vpack.c.b16 %v487, %v485
        %v508 = vpack.c.b16 %v488, %v486
        %v509 = vpack.c.b16 %v491, %v489
        %v510 = vpack.c.b16 %v492, %v490
        %v511 = vpack.c.b16 %v495, %v493
        %v512 = vpack.c.b16 %v496, %v494
        %v561 = vunpack.c.l.b16 %v417
        %v562 = vunpack.c.l.b16 %v418
        %v563 = vunpack.c.l.b16 %v419
        %v564 = vunpack.c.l.b16 %v420
        %v565 = vunpack.c.l.b16 %v421
        %v566 = vunpack.c.l.b16 %v422
        %v567 = vunpack.c.l.b16 %v423
        %v568 = vunpack.c.l.b16 %v424
        %v569 = vunpack.c.l.b16 %v425
        %v570 = vunpack.c.l.b16 %v426
        %v571 = vunpack.c.l.b16 %v427
        %v572 = vunpack.c.l.b16 %v428
        %v573 = vunpack.c.l.b16 %v429
        %v574 = vunpack.c.l.b16 %v430
        %v575 = vunpack.c.l.b16 %v431
        %v576 = vunpack.c.l.b16 %v432
        %v577 = vunpack.c.l.b16 %v433
        %v578 = vunpack.c.l.b16 %v434
        %v579 = vunpack.c.l.b16 %v435
        %v580 = vunpack.c.l.b16 %v436
        %v581 = vunpack.c.l.b16 %v437
        %v582 = vunpack.c.l.b16 %v438
        %v583 = vunpack.c.l.b16 %v439
        %v584 = vunpack.c.l.b16 %v440
        %v585 = vunpack.c.l.b16 %v441
        %v586 = vunpack.c.l.b16 %v442
        %v587 = vunpack.c.l.b16 %v443
        %v588 = vunpack.c.l.b16 %v444
        %v589 = vunpack.c.l.b16 %v445
        %v590 = vunpack.c.l.b16 %v446
        %v591 = vunpack.c.l.b16 %v447
        %v592 = vunpack.c.l.b16 %v448
        %v593 = vpack.c.b16 %v562, %v561
        %v594 = vpack.c.b16 %v564, %v563
        %v595 = vpack.c.b16 %v566, %v565
        %v596 = vpack.c.b16 %v568, %v567
        %v597 = vpack.c.b16 %v570, %v569
        %v598 = vpack.c.b16 %v572, %v571
        %v599 = vpack.c.b16 %v574, %v573
        %v600 = vpack.c.b16 %v576, %v575
        %v601 = vpack.c.b16 %v578, %v577
        %v602 = vpack.c.b16 %v580, %v579
        %v603 = vpack.c.b16 %v582, %v581
        %v604 = vpack.c.b16 %v584, %v583
        %v605 = vpack.c.b16 %v586, %v585
        %v606 = vpack.c.b16 %v588, %v587
        %v607 = vpack.c.b16 %v590, %v589
        %v608 = vpack.c.b16 %v592, %v591
        %625 = vmatprep.subr.bf16.mxu0 0
        %626 = vmatpush1.bf16.msra.mxu0 %v600
        %627 = vmatprep.subr.bf16.mxu0 0
        %628 = vmatpush1.bf16.msra.mxu0 %v599
        %629 = vmatprep.subr.bf16.mxu0 0
        %630 = vmatpush1.bf16.msra.mxu0 %v598
        %631 = vmatprep.subr.bf16.mxu0 0
        %632 = vmatpush1.bf16.msra.mxu0 %v597
        %633 = vmatprep.subr.bf16.mxu0 0
        %634 = vmatpush1.bf16.msra.mxu0 %v596
        %635 = vmatprep.subr.bf16.mxu0 0
        %636 = vmatpush1.bf16.msra.mxu0 %v595
        %637 = vmatprep.subr.bf16.mxu0 0
        %638 = vmatpush1.bf16.msra.mxu0 %v594
        %639 = vmatprep.subr.bf16.mxu0 0
        %640 = vmatpush1.bf16.msra.mxu0 %v593
        %641 = vmatprep.subr.bf16.mxu0 0
        %642 = vmatpush2.bf16.msra.mxu0 %v608
        %643 = vmatprep.subr.bf16.mxu0 0
        %644 = vmatpush2.bf16.msra.mxu0 %v607
        %645 = vmatprep.subr.bf16.mxu0 0
        %646 = vmatpush2.bf16.msra.mxu0 %v606
        %647 = vmatprep.subr.bf16.mxu0 0
        %648 = vmatpush2.bf16.msra.mxu0 %v605
        %649 = vmatprep.subr.bf16.mxu0 0
        %650 = vmatpush2.bf16.msra.mxu0 %v604
        %651 = vmatprep.subr.bf16.mxu0 0
        %652 = vmatpush2.bf16.msra.mxu0 %v603
        %653 = vmatprep.subr.bf16.mxu0 0
        %654 = vmatpush2.bf16.msra.mxu0 %v602
        %655 = vmatprep.subr.bf16.mxu0 0
        %656 = vmatpush2.bf16.msra.mxu0 %v601
        %657 = vmatprep.mubr.bf16.mxu0 %v498
        %658 = vmatmul.mubr.bf16.gmra.mxu0 %v497
        %v659 = vpop.f32.mrf.mxu0
        %v660 = vadd.f32 0.0, %v659
        %v661 = vpop.f32.mrf.mxu0
        %v662 = vpop.f32.mrf.mxu0
        %v663 = vadd.f32 0.0, %v662
        %v664 = vpop.f32.mrf.mxu0
        %665 = vmatprep.mubr.bf16.mxu0 %v500
        %666 = vmatmul.mubr.bf16.gmra.mxu0 %v499
        %v667 = vpop.f32.mrf.mxu0
        %v668 = vadd.f32 0.0, %v667
        %v669 = vpop.f32.mrf.mxu0
        %v670 = vpop.f32.mrf.mxu0
        %v671 = vadd.f32 0.0, %v670
        %v672 = vpop.f32.mrf.mxu0
        %673 = vmatprep.mubr.bf16.mxu0 %v502
        %674 = vmatmul.mubr.bf16.gmra.mxu0 %v501
        %v675 = vpop.f32.mrf.mxu0
        %v676 = vadd.f32 0.0, %v675
        %v677 = vpop.f32.mrf.mxu0
        %v678 = vpop.f32.mrf.mxu0
        %v679 = vadd.f32 0.0, %v678
        %v680 = vpop.f32.mrf.mxu0
        %681 = vmatprep.mubr.bf16.mxu0 %v504
        %682 = vmatmul.mubr.bf16.gmra.mxu0 %v503
        %v683 = vpop.f32.mrf.mxu0
        %v684 = vadd.f32 0.0, %v683
        %v685 = vpop.f32.mrf.mxu0
        %v686 = vpop.f32.mrf.mxu0
        %v687 = vadd.f32 0.0, %v686
        %v688 = vpop.f32.mrf.mxu0
        %689 = vmatprep.mubr.bf16.mxu0 %v506
        %690 = vmatmul.mubr.bf16.gmra.mxu0 %v505
        %v691 = vpop.f32.mrf.mxu0
        %v692 = vadd.f32 0.0, %v691
        %v693 = vpop.f32.mrf.mxu0
        %v694 = vpop.f32.mrf.mxu0
        %v695 = vadd.f32 0.0, %v694
        %v696 = vpop.f32.mrf.mxu0
        %697 = vmatprep.mubr.bf16.mxu0 %v508
        %698 = vmatmul.mubr.bf16.gmra.mxu0 %v507
        %v699 = vpop.f32.mrf.mxu0
        %v700 = vadd.f32 0.0, %v699
        %v701 = vpop.f32.mrf.mxu0
        %v702 = vpop.f32.mrf.mxu0
        %v703 = vadd.f32 0.0, %v702
        %v704 = vpop.f32.mrf.mxu0
        %705 = vmatprep.mubr.bf16.mxu0 %v510
        %706 = vmatmul.mubr.bf16.gmra.mxu0 %v509
        %v707 = vpop.f32.mrf.mxu0
        %v708 = vadd.f32 0.0, %v707
        %v709 = vpop.f32.mrf.mxu0
        %v710 = vpop.f32.mrf.mxu0
        %v711 = vadd.f32 0.0, %v710
        %v712 = vpop.f32.mrf.mxu0
        %713 = vmatprep.mubr.bf16.mxu0 %v512
        %714 = vmatmul.mubr.bf16.gmra.mxu0 %v511
        %v715 = vpop.f32.mrf.mxu0
        %v716 = vadd.f32 0.0, %v715
        %v717 = vpop.f32.mrf.mxu0
        %v718 = vpop.f32.mrf.mxu0
        %v719 = vadd.f32 0.0, %v718
        %v720 = vpop.f32.mrf.mxu0
        %721 = vdwg.mxu0
        %v722 = vld [vmem:[#allocation2] sm:$0xff]
        %v723 = vld [vmem:[#allocation2 + $0x8] sm:$0xff]
        %v724 = vld [vmem:[#allocation2 + $0x10] sm:$0xff]
        %v725 = vld [vmem:[#allocation2 + $0x18] sm:$0xff]
        %v726 = vld [vmem:[#allocation2 + $0x20] sm:$0xff]
        %v727 = vld [vmem:[#allocation2 + $0x28] sm:$0xff]
        %v728 = vld [vmem:[#allocation2 + $0x30] sm:$0xff]
        %v729 = vld [vmem:[#allocation2 + $0x38] sm:$0xff]
        %v730 = vld [vmem:[#allocation2 + $0x40] sm:$0xff]
        %v731 = vld [vmem:[#allocation2 + $0x48] sm:$0xff]
        %v732 = vld [vmem:[#allocation2 + $0x50] sm:$0xff]
        %v733 = vld [vmem:[#allocation2 + $0x58] sm:$0xff]
        %v734 = vld [vmem:[#allocation2 + $0x60] sm:$0xff]
        %v735 = vld [vmem:[#allocation2 + $0x68] sm:$0xff]
        %v736 = vld [vmem:[#allocation2 + $0x70] sm:$0xff]
        %v737 = vld [vmem:[#allocation2 + $0x78] sm:$0xff]
        %v738 = vld [vmem:[%s326] sm:$0xf]
        %v739 = vld [vmem:[%s326 + $0x4] sm:$0xf]
        %v740 = vld [vmem:[%s326 + $0x8] sm:$0xf]
        %v741 = vld [vmem:[%s326 + $0xc] sm:$0xf]
        %v742 = vld [vmem:[%s326 + $0x10] sm:$0xf]
        %v743 = vld [vmem:[%s326 + $0x14] sm:$0xf]
        %v744 = vld [vmem:[%s326 + $0x18] sm:$0xf]
        %v745 = vld [vmem:[%s326 + $0x1c] sm:$0xf]
        %v746 = vld [vmem:[%s326 + $0x20] sm:$0xf]
        %v747 = vld [vmem:[%s326 + $0x24] sm:$0xf]
        %v748 = vld [vmem:[%s326 + $0x28] sm:$0xf]
        %v749 = vld [vmem:[%s326 + $0x2c] sm:$0xf]
        %v750 = vld [vmem:[%s326 + $0x30] sm:$0xf]
        %v751 = vld [vmem:[%s326 + $0x34] sm:$0xf]
        %v752 = vld [vmem:[%s326 + $0x38] sm:$0xf]
        %v753 = vld [vmem:[%s326 + $0x3c] sm:$0xf]
        %v754 = vpack.c.bf16 %v663, %v660
        %v755 = vpack.c.bf16 %v671, %v668
        %v756 = vpack.c.bf16 %v679, %v676
        %v757 = vpack.c.bf16 %v687, %v684
        %v758 = vpack.c.bf16 %v695, %v692
        %v759 = vpack.c.bf16 %v703, %v700
        %v760 = vpack.c.bf16 %v711, %v708
        %v761 = vpack.c.bf16 %v719, %v716
        %v778 = vunpack.c.l.b16 %v738
        %v779 = vunpack.c.l.b16 %v739
        %v780 = vunpack.c.l.b16 %v740
        %v781 = vunpack.c.l.b16 %v741
        %v782 = vunpack.c.l.b16 %v742
        %v783 = vunpack.c.l.b16 %v743
        %v784 = vunpack.c.l.b16 %v744
        %v785 = vunpack.c.l.b16 %v745
        %v786 = vunpack.c.l.b16 %v746
        %v787 = vunpack.c.l.b16 %v747
        %v788 = vunpack.c.l.b16 %v748
        %v789 = vunpack.c.l.b16 %v749
        %v790 = vunpack.c.l.b16 %v750
        %v791 = vunpack.c.l.b16 %v751
        %v792 = vunpack.c.l.b16 %v752
        %v793 = vunpack.c.l.b16 %v753
        %v794 = vpack.c.b16 %v779, %v778
        %v795 = vpack.c.b16 %v781, %v780
        %v796 = vpack.c.b16 %v783, %v782
        %v797 = vpack.c.b16 %v785, %v784
        %v798 = vpack.c.b16 %v787, %v786
        %v799 = vpack.c.b16 %v789, %v788
        %v800 = vpack.c.b16 %v791, %v790
        %v801 = vpack.c.b16 %v793, %v792
        %810 = vmatprep.subr.bf16.mxu0 0
        %811 = vmatpush1.bf16.msra.mxu0 %v761
        %812 = vmatprep.subr.bf16.mxu0 0
        %813 = vmatpush1.bf16.msra.mxu0 %v760
        %814 = vmatprep.subr.bf16.mxu0 0
        %815 = vmatpush1.bf16.msra.mxu0 %v759
        %816 = vmatprep.subr.bf16.mxu0 0
        %817 = vmatpush1.bf16.msra.mxu0 %v758
        %818 = vmatprep.subr.bf16.mxu0 0
        %819 = vmatpush1.bf16.msra.mxu0 %v757
        %820 = vmatprep.subr.bf16.mxu0 0
        %821 = vmatpush1.bf16.msra.mxu0 %v756
        %822 = vmatprep.subr.bf16.mxu0 0
        %823 = vmatpush1.bf16.msra.mxu0 %v755
        %824 = vmatprep.subr.bf16.mxu0 0
        %825 = vmatpush1.bf16.msra.mxu0 %v754
        %826 = vmatprep.subr.bf16.mxu0 0
        %827 = vmatpush2.bf16.msra.mxu0 0
        %828 = vmatprep.subr.bf16.mxu0 0
        %829 = vmatpush2.bf16.msra.mxu0 0
        %830 = vmatprep.subr.bf16.mxu0 0
        %831 = vmatpush2.bf16.msra.mxu0 0
        %832 = vmatprep.subr.bf16.mxu0 0
        %833 = vmatpush2.bf16.msra.mxu0 0
        %834 = vmatprep.subr.bf16.mxu0 0
        %835 = vmatpush2.bf16.msra.mxu0 0
        %836 = vmatprep.subr.bf16.mxu0 0
        %837 = vmatpush2.bf16.msra.mxu0 0
        %838 = vmatprep.subr.bf16.mxu0 0
        %839 = vmatpush2.bf16.msra.mxu0 0
        %840 = vmatprep.subr.bf16.mxu0 0
        %841 = vmatpush2.bf16.msra.mxu0 0
        %842 = vmatprep.mubr.bf16.mxu0 0
        %843 = vmatmul.mubr.bf16.gmra.mxu0 %v794
        %v844 = vpop.f32.mrf.mxu0
        %v845 = vadd.f32 0.0, %v844
        %v846 = vpop.f32.mrf.mxu0
        %v847 = vpop.f32.mrf.mxu0
        %v848 = vadd.f32 0.0, %v847
        %v849 = vpop.f32.mrf.mxu0
        %850 = vmatprep.mubr.bf16.mxu0 0
        %851 = vmatmul.mubr.bf16.gmra.mxu0 %v795
        %v852 = vpop.f32.mrf.mxu0
        %v853 = vadd.f32 0.0, %v852
        %v854 = vpop.f32.mrf.mxu0
        %v855 = vpop.f32.mrf.mxu0
        %v856 = vadd.f32 0.0, %v855
        %v857 = vpop.f32.mrf.mxu0
        %858 = vmatprep.mubr.bf16.mxu0 0
        %859 = vmatmul.mubr.bf16.gmra.mxu0 %v796
        %v860 = vpop.f32.mrf.mxu0
        %v861 = vadd.f32 0.0, %v860
        %v862 = vpop.f32.mrf.mxu0
        %v863 = vpop.f32.mrf.mxu0
        %v864 = vadd.f32 0.0, %v863
        %v865 = vpop.f32.mrf.mxu0
        %866 = vmatprep.mubr.bf16.mxu0 0
        %867 = vmatmul.mubr.bf16.gmra.mxu0 %v797
        %v868 = vpop.f32.mrf.mxu0
        %v869 = vadd.f32 0.0, %v868
        %v870 = vpop.f32.mrf.mxu0
        %v871 = vpop.f32.mrf.mxu0
        %v872 = vadd.f32 0.0, %v871
        %v873 = vpop.f32.mrf.mxu0
        %874 = vmatprep.mubr.bf16.mxu0 0
        %875 = vmatmul.mubr.bf16.gmra.mxu0 %v798
        %v876 = vpop.f32.mrf.mxu0
        %v877 = vadd.f32 0.0, %v876
        %v878 = vpop.f32.mrf.mxu0
        %v879 = vpop.f32.mrf.mxu0
        %v880 = vadd.f32 0.0, %v879
        %v881 = vpop.f32.mrf.mxu0
        %882 = vmatprep.mubr.bf16.mxu0 0
        %883 = vmatmul.mubr.bf16.gmra.mxu0 %v799
        %v884 = vpop.f32.mrf.mxu0
        %v885 = vadd.f32 0.0, %v884
        %v886 = vpop.f32.mrf.mxu0
        %v887 = vpop.f32.mrf.mxu0
        %v888 = vadd.f32 0.0, %v887
        %v889 = vpop.f32.mrf.mxu0
        %890 = vmatprep.mubr.bf16.mxu0 0
        %891 = vmatmul.mubr.bf16.gmra.mxu0 %v800
        %v892 = vpop.f32.mrf.mxu0
        %v893 = vadd.f32 0.0, %v892
        %v894 = vpop.f32.mrf.mxu0
        %v895 = vpop.f32.mrf.mxu0
        %v896 = vadd.f32 0.0, %v895
        %v897 = vpop.f32.mrf.mxu0
        %898 = vmatprep.mubr.bf16.mxu0 0
        %899 = vmatmul.mubr.bf16.gmra.mxu0 %v801
        %v900 = vpop.f32.mrf.mxu0
        %v901 = vadd.f32 0.0, %v900
        %v902 = vpop.f32.mrf.mxu0
        %v903 = vpop.f32.mrf.mxu0
        %v904 = vadd.f32 0.0, %v903
        %v905 = vpop.f32.mrf.mxu0
        %906 = vdwg.mxu0
        %v907 = vadd.f32 %v722, %v845
        %v908 = vadd.f32 %v723, %v848
        %v909 = vadd.f32 %v724, %v853
        %v910 = vadd.f32 %v725, %v856
        %v911 = vadd.f32 %v726, %v861
        %v912 = vadd.f32 %v727, %v864
        %v913 = vadd.f32 %v728, %v869
        %v914 = vadd.f32 %v729, %v872
        %v915 = vadd.f32 %v730, %v877
        %v916 = vadd.f32 %v731, %v880
        %v917 = vadd.f32 %v732, %v885
        %v918 = vadd.f32 %v733, %v888
        %v919 = vadd.f32 %v734, %v893
        %v920 = vadd.f32 %v735, %v896
        %v921 = vadd.f32 %v736, %v901
        %v922 = vadd.f32 %v737, %v904
        %923 = vst [vmem:[#allocation2] sm:$0xff] %v907
        %924 = vst [vmem:[#allocation2 + $0x8] sm:$0xff] %v908
        %925 = vst [vmem:[#allocation2 + $0x10] sm:$0xff] %v909
        %926 = vst [vmem:[#allocation2 + $0x18] sm:$0xff] %v910
        %927 = vst [vmem:[#allocation2 + $0x20] sm:$0xff] %v911
        %928 = vst [vmem:[#allocation2 + $0x28] sm:$0xff] %v912
        %929 = vst [vmem:[#allocation2 + $0x30] sm:$0xff] %v913
        %930 = vst [vmem:[#allocation2 + $0x38] sm:$0xff] %v914
        %931 = vst [vmem:[#allocation2 + $0x40] sm:$0xff] %v915
        %932 = vst [vmem:[#allocation2 + $0x48] sm:$0xff] %v916
        %933 = vst [vmem:[#allocation2 + $0x50] sm:$0xff] %v917
        %934 = vst [vmem:[#allocation2 + $0x58] sm:$0xff] %v918
        %935 = vst [vmem:[#allocation2 + $0x60] sm:$0xff] %v919
        %936 = vst [vmem:[#allocation2 + $0x68] sm:$0xff] %v920
        %937 = vst [vmem:[#allocation2 + $0x70] sm:$0xff] %v921
        %938 = vst [vmem:[#allocation2 + $0x78] sm:$0xff] %v922
        %p939 = scmp.eq.s32.totalorder %s30, 1
        // Predicated region
        $region65: #{tpu_custom_call.1} parent=39 // pred_check
          %p940 = pneg %p939
        $region66: #{tpu_custom_call.1} parent=39 // pred_check_branch
          %942 = sbr.rel (%p940) target = $region68
        $region67: #{tpu_custom_call.1} parent=39 // pred_region
          %v943 = vld [vmem:[#allocation2] sm:$0xff]
          %v944 = vld [vmem:[#allocation2 + $0x8] sm:$0xff]
          %v945 = vld [vmem:[#allocation2 + $0x10] sm:$0xff]
          %v946 = vld [vmem:[#allocation2 + $0x18] sm:$0xff]
          %v947 = vld [vmem:[#allocation2 + $0x20] sm:$0xff]
          %v948 = vld [vmem:[#allocation2 + $0x28] sm:$0xff]
          %v949 = vld [vmem:[#allocation2 + $0x30] sm:$0xff]
          %v950 = vld [vmem:[#allocation2 + $0x38] sm:$0xff]
          %v951 = vld [vmem:[#allocation2 + $0x40] sm:$0xff]
          %v952 = vld [vmem:[#allocation2 + $0x48] sm:$0xff]
          %v953 = vld [vmem:[#allocation2 + $0x50] sm:$0xff]
          %v954 = vld [vmem:[#allocation2 + $0x58] sm:$0xff]
          %v955 = vld [vmem:[#allocation2 + $0x60] sm:$0xff]
          %v956 = vld [vmem:[#allocation2 + $0x68] sm:$0xff]
          %v957 = vld [vmem:[#allocation2 + $0x70] sm:$0xff]
          %v958 = vld [vmem:[#allocation2 + $0x78] sm:$0xff]
          %v959 = vld [vmem:[%s335] sm:$0xff]
          %v960 = vld [vmem:[%s335 + $0x8] sm:$0xff]
          %v961 = vld [vmem:[%s335 + $0x10] sm:$0xff]
          %v962 = vld [vmem:[%s335 + $0x18] sm:$0xff]
          %v963 = vld [vmem:[%s335 + $0x20] sm:$0xff]
          %v964 = vld [vmem:[%s335 + $0x28] sm:$0xff]
          %v965 = vld [vmem:[%s335 + $0x30] sm:$0xff]
          %v966 = vld [vmem:[%s335 + $0x38] sm:$0xff]
          %v967 = vld [vmem:[%s335 + $0x40] sm:$0xff]
          %v968 = vld [vmem:[%s335 + $0x48] sm:$0xff]
          %v969 = vld [vmem:[%s335 + $0x50] sm:$0xff]
          %v970 = vld [vmem:[%s335 + $0x58] sm:$0xff]
          %v971 = vld [vmem:[%s335 + $0x60] sm:$0xff]
          %v972 = vld [vmem:[%s335 + $0x68] sm:$0xff]
          %v973 = vld [vmem:[%s335 + $0x70] sm:$0xff]
          %v974 = vld [vmem:[%s335 + $0x78] sm:$0xff]
          %v975 = vadd.f32 %v943, %v959
          %v976 = vadd.f32 %v944, %v960
          %v977 = vadd.f32 %v945, %v961
          %v978 = vadd.f32 %v946, %v962
          %v979 = vadd.f32 %v947, %v963
          %v980 = vadd.f32 %v948, %v964
          %v981 = vadd.f32 %v949, %v965
          %v982 = vadd.f32 %v950, %v966
          %v983 = vadd.f32 %v951, %v967
          %v984 = vadd.f32 %v952, %v968
          %v985 = vadd.f32 %v953, %v969
          %v986 = vadd.f32 %v954, %v970
          %v987 = vadd.f32 %v955, %v971
          %v988 = vadd.f32 %v956, %v972
          %v989 = vadd.f32 %v957, %v973
          %v990 = vadd.f32 %v958, %v974
          %v991 = vmax.f32 %v975, 0.0
          %v992 = vmax.f32 %v976, 0.0
          %v993 = vmax.f32 %v977, 0.0
          %v994 = vmax.f32 %v978, 0.0
          %v995 = vmax.f32 %v979, 0.0
          %v996 = vmax.f32 %v980, 0.0
          %v997 = vmax.f32 %v981, 0.0
          %v998 = vmax.f32 %v982, 0.0
          %v999 = vmax.f32 %v983, 0.0
          %v1000 = vmax.f32 %v984, 0.0
          %v1001 = vmax.f32 %v985, 0.0
          %v1002 = vmax.f32 %v986, 0.0
          %v1003 = vmax.f32 %v987, 0.0
          %v1004 = vmax.f32 %v988, 0.0
          %v1005 = vmax.f32 %v989, 0.0
          %v1006 = vmax.f32 %v990, 0.0
          %v1007 = vpack.c.bf16 %v992, %v991
          %v1008 = vpack.c.bf16 %v994, %v993
          %v1009 = vpack.c.bf16 %v996, %v995
          %v1010 = vpack.c.bf16 %v998, %v997
          %v1011 = vpack.c.bf16 %v1000, %v999
          %v1012 = vpack.c.bf16 %v1002, %v1001
          %v1013 = vpack.c.bf16 %v1004, %v1003
          %v1014 = vpack.c.bf16 %v1006, %v1005
          %v1015 = vld [vmem:[#allocation10] sm:$0xff]
          %v1016 = vld [vmem:[#allocation10 + $0x8] sm:$0xff]
          %v1017 = vld [vmem:[#allocation10 + $0x10] sm:$0xff]
          %v1018 = vld [vmem:[#allocation10 + $0x18] sm:$0xff]
          %v1019 = vld [vmem:[#allocation10 + $0x20] sm:$0xff]
          %v1020 = vld [vmem:[#allocation10 + $0x28] sm:$0xff]
          %v1021 = vld [vmem:[#allocation10 + $0x30] sm:$0xff]
          %v1022 = vld [vmem:[#allocation10 + $0x38] sm:$0xff]
          %v1023 = vld [vmem:[#allocation10 + $0x40] sm:$0xff]
          %v1024 = vld [vmem:[#allocation10 + $0x48] sm:$0xff]
          %v1025 = vld [vmem:[#allocation10 + $0x50] sm:$0xff]
          %v1026 = vld [vmem:[#allocation10 + $0x58] sm:$0xff]
          %v1027 = vld [vmem:[#allocation10 + $0x60] sm:$0xff]
          %v1028 = vld [vmem:[#allocation10 + $0x68] sm:$0xff]
          %v1029 = vld [vmem:[#allocation10 + $0x70] sm:$0xff]
          %v1030 = vld [vmem:[#allocation10 + $0x78] sm:$0xff]
          %v1047 = vunpack.c.l.b16 %v1015
          %v1048 = vunpack.c.h.b16 %v1015
          %v1049 = vunpack.c.l.b16 %v1016
          %v1050 = vunpack.c.h.b16 %v1016
          %v1051 = vunpack.c.l.b16 %v1017
          %v1052 = vunpack.c.h.b16 %v1017
          %v1053 = vunpack.c.l.b16 %v1018
          %v1054 = vunpack.c.h.b16 %v1018
          %v1055 = vunpack.c.l.b16 %v1019
          %v1056 = vunpack.c.h.b16 %v1019
          %v1057 = vunpack.c.l.b16 %v1020
          %v1058 = vunpack.c.h.b16 %v1020
          %v1059 = vunpack.c.l.b16 %v1021
          %v1060 = vunpack.c.h.b16 %v1021
          %v1061 = vunpack.c.l.b16 %v1022
          %v1062 = vunpack.c.h.b16 %v1022
          %v1063 = vunpack.c.l.b16 %v1023
          %v1064 = vunpack.c.h.b16 %v1023
          %v1065 = vunpack.c.l.b16 %v1024
          %v1066 = vunpack.c.h.b16 %v1024
          %v1067 = vunpack.c.l.b16 %v1025
          %v1068 = vunpack.c.h.b16 %v1025
          %v1069 = vunpack.c.l.b16 %v1026
          %v1070 = vunpack.c.h.b16 %v1026
          %v1071 = vunpack.c.l.b16 %v1027
          %v1072 = vunpack.c.h.b16 %v1027
          %v1073 = vunpack.c.l.b16 %v1028
          %v1074 = vunpack.c.h.b16 %v1028
          %v1075 = vunpack.c.l.b16 %v1029
          %v1076 = vunpack.c.h.b16 %v1029
          %v1077 = vunpack.c.l.b16 %v1030
          %v1078 = vunpack.c.h.b16 %v1030
          %v1079 = vpack.c.b16 %v1049, %v1047
          %v1080 = vpack.c.b16 %v1050, %v1048
          %v1081 = vpack.c.b16 %v1053, %v1051
          %v1082 = vpack.c.b16 %v1054, %v1052
          %v1083 = vpack.c.b16 %v1057, %v1055
          %v1084 = vpack.c.b16 %v1058, %v1056
          %v1085 = vpack.c.b16 %v1061, %v1059
          %v1086 = vpack.c.b16 %v1062, %v1060
          %v1087 = vpack.c.b16 %v1065, %v1063
          %v1088 = vpack.c.b16 %v1066, %v1064
          %v1089 = vpack.c.b16 %v1069, %v1067
          %v1090 = vpack.c.b16 %v1070, %v1068
          %v1091 = vpack.c.b16 %v1073, %v1071
          %v1092 = vpack.c.b16 %v1074, %v1072
          %v1093 = vpack.c.b16 %v1077, %v1075
          %v1094 = vpack.c.b16 %v1078, %v1076
          %1111 = vmatprep.subr.bf16.mxu0 %v1094
          %1112 = vmatpush1.bf16.msra.mxu0 %v1093
          %1113 = vmatprep.subr.bf16.mxu0 %v1092
          %1114 = vmatpush1.bf16.msra.mxu0 %v1091
          %1115 = vmatprep.subr.bf16.mxu0 %v1090
          %1116 = vmatpush1.bf16.msra.mxu0 %v1089
          %1117 = vmatprep.subr.bf16.mxu0 %v1088
          %1118 = vmatpush1.bf16.msra.mxu0 %v1087
          %1119 = vmatprep.subr.bf16.mxu0 %v1086
          %1120 = vmatpush1.bf16.msra.mxu0 %v1085
          %1121 = vmatprep.subr.bf16.mxu0 %v1084
          %1122 = vmatpush1.bf16.msra.mxu0 %v1083
          %1123 = vmatprep.subr.bf16.mxu0 %v1082
          %1124 = vmatpush1.bf16.msra.mxu0 %v1081
          %1125 = vmatprep.subr.bf16.mxu0 %v1080
          %1126 = vmatpush1.bf16.msra.mxu0 %v1079
          %1127 = vmatprep.subr.bf16.mxu0 0
          %1128 = vmatpush2.bf16.msra.mxu0 0
          %1129 = vmatprep.subr.bf16.mxu0 0
          %1130 = vmatpush2.bf16.msra.mxu0 0
          %1131 = vmatprep.subr.bf16.mxu0 0
          %1132 = vmatpush2.bf16.msra.mxu0 0
          %1133 = vmatprep.subr.bf16.mxu0 0
          %1134 = vmatpush2.bf16.msra.mxu0 0
          %1135 = vmatprep.subr.bf16.mxu0 0
          %1136 = vmatpush2.bf16.msra.mxu0 0
          %1137 = vmatprep.subr.bf16.mxu0 0
          %1138 = vmatpush2.bf16.msra.mxu0 0
          %1139 = vmatprep.subr.bf16.mxu0 0
          %1140 = vmatpush2.bf16.msra.mxu0 0
          %1141 = vmatprep.subr.bf16.mxu0 0
          %1142 = vmatpush2.bf16.msra.mxu0 0
          %1143 = vmatprep.mubr.bf16.mxu0 0
          %1144 = vmatmul.mubr.bf16.gmra.mxu0 %v1007
          %v1145 = vpop.f32.mrf.mxu0
          %v1146 = vadd.f32 0.0, %v1145
          %v1147 = vpop.f32.mrf.mxu0
          %v1148 = vadd.f32 0.0, %v1147
          %v1149 = vpop.f32.mrf.mxu0
          %v1150 = vadd.f32 0.0, %v1149
          %v1151 = vpop.f32.mrf.mxu0
          %v1152 = vadd.f32 0.0, %v1151
          %1153 = vmatprep.mubr.bf16.mxu0 0
          %1154 = vmatmul.mubr.bf16.gmra.mxu0 %v1008
          %v1155 = vpop.f32.mrf.mxu0
          %v1156 = vadd.f32 0.0, %v1155
          %v1157 = vpop.f32.mrf.mxu0
          %v1158 = vadd.f32 0.0, %v1157
          %v1159 = vpop.f32.mrf.mxu0
          %v1160 = vadd.f32 0.0, %v1159
          %v1161 = vpop.f32.mrf.mxu0
          %v1162 = vadd.f32 0.0, %v1161
          %1163 = vmatprep.mubr.bf16.mxu0 0
          %1164 = vmatmul.mubr.bf16.gmra.mxu0 %v1009
          %v1165 = vpop.f32.mrf.mxu0
          %v1166 = vadd.f32 0.0, %v1165
          %v1167 = vpop.f32.mrf.mxu0
          %v1168 = vadd.f32 0.0, %v1167
          %v1169 = vpop.f32.mrf.mxu0
          %v1170 = vadd.f32 0.0, %v1169
          %v1171 = vpop.f32.mrf.mxu0
          %v1172 = vadd.f32 0.0, %v1171
          %1173 = vmatprep.mubr.bf16.mxu0 0
          %1174 = vmatmul.mubr.bf16.gmra.mxu0 %v1010
          %v1175 = vpop.f32.mrf.mxu0
          %v1176 = vadd.f32 0.0, %v1175
          %v1177 = vpop.f32.mrf.mxu0
          %v1178 = vadd.f32 0.0, %v1177
          %v1179 = vpop.f32.mrf.mxu0
          %v1180 = vadd.f32 0.0, %v1179
          %v1181 = vpop.f32.mrf.mxu0
          %v1182 = vadd.f32 0.0, %v1181
          %1183 = vmatprep.mubr.bf16.mxu0 0
          %1184 = vmatmul.mubr.bf16.gmra.mxu0 %v1011
          %v1185 = vpop.f32.mrf.mxu0
          %v1186 = vadd.f32 0.0, %v1185
          %v1187 = vpop.f32.mrf.mxu0
          %v1188 = vadd.f32 0.0, %v1187
          %v1189 = vpop.f32.mrf.mxu0
          %v1190 = vadd.f32 0.0, %v1189
          %v1191 = vpop.f32.mrf.mxu0
          %v1192 = vadd.f32 0.0, %v1191
          %1193 = vmatprep.mubr.bf16.mxu0 0
          %1194 = vmatmul.mubr.bf16.gmra.mxu0 %v1012
          %v1195 = vpop.f32.mrf.mxu0
          %v1196 = vadd.f32 0.0, %v1195
          %v1197 = vpop.f32.mrf.mxu0
          %v1198 = vadd.f32 0.0, %v1197
          %v1199 = vpop.f32.mrf.mxu0
          %v1200 = vadd.f32 0.0, %v1199
          %v1201 = vpop.f32.mrf.mxu0
          %v1202 = vadd.f32 0.0, %v1201
          %1203 = vmatprep.mubr.bf16.mxu0 0
          %1204 = vmatmul.mubr.bf16.gmra.mxu0 %v1013
          %v1205 = vpop.f32.mrf.mxu0
          %v1206 = vadd.f32 0.0, %v1205
          %v1207 = vpop.f32.mrf.mxu0
          %v1208 = vadd.f32 0.0, %v1207
          %v1209 = vpop.f32.mrf.mxu0
          %v1210 = vadd.f32 0.0, %v1209
          %v1211 = vpop.f32.mrf.mxu0
          %v1212 = vadd.f32 0.0, %v1211
          %1213 = vmatprep.mubr.bf16.mxu0 0
          %1214 = vmatmul.mubr.bf16.gmra.mxu0 %v1014
          %v1215 = vpop.f32.mrf.mxu0
          %v1216 = vadd.f32 0.0, %v1215
          %v1217 = vpop.f32.mrf.mxu0
          %v1218 = vadd.f32 0.0, %v1217
          %v1219 = vpop.f32.mrf.mxu0
          %v1220 = vadd.f32 0.0, %v1219
          %v1221 = vpop.f32.mrf.mxu0
          %v1222 = vadd.f32 0.0, %v1221
          %1223 = vdwg.mxu0
          %1224 = vst [vmem:[%s375] sm:$0xff] %v1146
          %1225 = vst [vmem:[%s375 + $0x8] sm:$0xff] %v1148
          %1226 = vst [vmem:[%s375 + $0x10] sm:$0xff] %v1150
          %1227 = vst [vmem:[%s375 + $0x18] sm:$0xff] %v1152
          %1228 = vst [vmem:[%s375 + $0x20] sm:$0xff] %v1156
          %1229 = vst [vmem:[%s375 + $0x28] sm:$0xff] %v1158
          %1230 = vst [vmem:[%s375 + $0x30] sm:$0xff] %v1160
          %1231 = vst [vmem:[%s375 + $0x38] sm:$0xff] %v1162
          %1232 = vst [vmem:[%s375 + $0x40] sm:$0xff] %v1166
          %1233 = vst [vmem:[%s375 + $0x48] sm:$0xff] %v1168
          %1234 = vst [vmem:[%s375 + $0x50] sm:$0xff] %v1170
          %1235 = vst [vmem:[%s375 + $0x58] sm:$0xff] %v1172
          %1236 = vst [vmem:[%s375 + $0x60] sm:$0xff] %v1176
          %1237 = vst [vmem:[%s375 + $0x68] sm:$0xff] %v1178
          %1238 = vst [vmem:[%s375 + $0x70] sm:$0xff] %v1180
          %1239 = vst [vmem:[%s375 + $0x78] sm:$0xff] %v1182
          %1240 = vst [vmem:[%s375 + $0x80] sm:$0xff] %v1186
          %1241 = vst [vmem:[%s375 + $0x88] sm:$0xff] %v1188
          %1242 = vst [vmem:[%s375 + $0x90] sm:$0xff] %v1190
          %1243 = vst [vmem:[%s375 + $0x98] sm:$0xff] %v1192
          %1244 = vst [vmem:[%s375 + $0xa0] sm:$0xff] %v1196
          %1245 = vst [vmem:[%s375 + $0xa8] sm:$0xff] %v1198
          %1246 = vst [vmem:[%s375 + $0xb0] sm:$0xff] %v1200
          %1247 = vst [vmem:[%s375 + $0xb8] sm:$0xff] %v1202
          %1248 = vst [vmem:[%s375 + $0xc0] sm:$0xff] %v1206
          %1249 = vst [vmem:[%s375 + $0xc8] sm:$0xff] %v1208
          %1250 = vst [vmem:[%s375 + $0xd0] sm:$0xff] %v1210
          %1251 = vst [vmem:[%s375 + $0xd8] sm:$0xff] %v1212
          %1252 = vst [vmem:[%s375 + $0xe0] sm:$0xff] %v1216
          %1253 = vst [vmem:[%s375 + $0xe8] sm:$0xff] %v1218
          %1254 = vst [vmem:[%s375 + $0xf0] sm:$0xff] %v1220
          %1255 = vst [vmem:[%s375 + $0xf8] sm:$0xff] %v1222
        $region68: #{tpu_custom_call.1} parent=39 // pred_fallthru
          _
        %s1256 = sand.u32 %s176, 1
        %s1257 = scalar_lea.sflag [#allocation5], %s1256
        %s1258 = sand.u32 %s176, 1
        %s1259 = smul.addr %s1258, 256
        %s1260 = scalar_lea.vmem [#allocation11], %s1259
        // Predicated region
        $region69: #{tpu_custom_call.1} parent=39 // pred_check
          %p1261 = pneg %p186
        $region70: #{tpu_custom_call.1} parent=39 // pred_check_branch
          %1263 = sbr.rel (%p1261) target = $region72
        $region71: #{tpu_custom_call.1} parent=39 // pred_region
          %s1264 = smul.u32 16, %s29
          %s1266 = ssub.s32 4096, 4096
          %1267 = vsyncadd %s1257, %s1266
          %s1268 = smul.addr %s1264, 2
          %s1269 = smul.addr %s28, 64
          %s1270 = sadd.s32 %s1268, %s1269
          %s1271 = smul.addr %s1270, 128
          %s1272 = scalar_lea.hbm %s5, %s1271
          %s1273 = sshll.u32 %s1260, 4
          %s1274 = int_to_ptr.vmem [resolvable:$true] %s1273
          %1279 = dma.vmem_to_hbm [thread:$0]  %s1274, 4096, %s1272, %s1257, 256, 256, 16
        $region72: #{tpu_custom_call.1} parent=39 // pred_fallthru
          _
      $region40: #{tpu_custom_call.1} parent=5 // pred_fallthru
        _
      %p1280 = scmp.le.s32.totalorder 2, %s18
      // Predicated region
      $region73: #{tpu_custom_call.1} parent=5 // pred_check
        %p1281 = pneg %p1280
      $region74: #{tpu_custom_call.1} parent=5 // pred_check_branch
        %1283 = sbr.rel (%p1281) target = $region76
      $region75: #{tpu_custom_call.1} parent=5 // pred_region
        %s1284 = ssub.s32 %s18, 2
        // Predicated region
        $region77: #{tpu_custom_call.1} parent=75 // pred_check
          %p1285 = pneg %p192
        $region78: #{tpu_custom_call.1} parent=75 // pred_check_branch
          %1287 = sbr.rel (%p1285) target = $region80
        $region79: #{tpu_custom_call.1} parent=75 // pred_region
          %s1288 = sand.u32 %s177, 1
          %s1289 = scalar_lea.sflag [#allocation5], %s1288
          %s1290 = sand.u32 %s177, 1
          %s1291 = smul.addr %s1290, 256
          %s1292 = scalar_lea.vmem [#allocation11], %s1291
          %1293 = dma.done %s1289, 4096
        $region80: #{tpu_custom_call.1} parent=75 // pred_fallthru
          _
      $region76: #{tpu_custom_call.1} parent=5 // pred_fallthru
        _
    $region6: #{tpu_custom_call.1} parent=1 // loop_footer
      %s22 = sadd.s32 1, %s18
    $region7: #{tpu_custom_call.1} parent=1 // loop_footer_branch
      %17 = sbr.rel target = $region3
    $region8: #{tpu_custom_call.1} parent=1 // loop_exit
      _
    %1294 = vsyncpa [#allocation4], 1
    %s1295 = scalar_lea.sflag [#allocation4], 1
    %1296 = vsyncpa %s1295, 1
    %1297 = vsyncpa [#allocation7], 1
    %1298 = vsyncpa [#allocation5], 1
    %s1299 = scalar_lea.sflag [#allocation5], 1
    %1300 = vsyncpa %s1299, 1

// kernel: tpu_custom_call.1
$region0: #{tpu_custom_call.1}
  #allocation0 [shape = 'u32[]', space=smem, size = 0x4, offset = 0x4, fixed_abs, tag = 'smem constant byte address 0x4 - core index']
  #allocation1 [shape = 'u32[144,128]{1,0:T(1,128)}', space=vmem, size = 0x12000, scoped, tag = 'internal scratch']
  #allocation2 [shape = 'f32[128,128]{1,0:T(8,128)}', space=vmem, size = 0x10000, scoped, tag = 'scratch operand']
  %s0 = inlined_call_operand.hbm [shape: bf16[2,256,256], index: 0, kind: input, shape index: {}]
  %s1 = inlined_call_operand.hbm [shape: bf16[256,128], index: 1, kind: input, shape index: {}]
  %s2 = inlined_call_operand.hbm [shape: bf16[256,256], index: 2, kind: input, shape index: {}]
  %s3 = inlined_call_operand.hbm [shape: f32[256,128], index: 3, kind: input, shape index: {}]
  %s4 = inlined_call_operand.hbm [shape: bf16[128,256], index: 4, kind: input, shape index: {}]
  %s5 = inlined_call_operand.hbm [shape: f32[2,256,256], index: 5, kind: output, shape index: {}]
  %s6 = sld [smem:[#allocation0]]
  $region81: #{tpu_custom_call.1} parent=0
    _
  %s8 = ssub.s32 1, %s6
  %s9 = scalar_select 0, %s8, %s6
  $region1: #{tpu_custom_call.1} parent=0
    #allocation3 [shape = 'u8[131072]{0}', space=vmem, size = 0x20000, scoped, tag = 'input window, operand 0']
    #allocation4 [shape = 's32[2]{0}', space=sflag, size = 0x8, scoped, tag = 'scoped memory for tpu_custom_call.1']
    #allocation5 [shape = 's32[2]{0}', space=sflag, size = 0x8, scoped, tag = 'scoped memory for tpu_custom_call.1']
    #allocation6 [shape = 'u8[65536]{0}', space=vmem, size = 0x10000, scoped, tag = 'input window, operand 1, single buffered']
    #allocation7 [shape = 's32[1]{0}', space=sflag, size = 0x4, scoped, tag = 'scoped memory for tpu_custom_call.1']
    #allocation8 [shape = 'u8[65536]{0}', space=vmem, size = 0x10000, scoped, tag = 'input window, operand 2']
    #allocation9 [shape = 'u8[131072]{0}', space=vmem, size = 0x20000, scoped, tag = 'input window, operand 3']
    #allocation10 [shape = 'u8[65536]{0}', space=vmem, size = 0x10000, scoped, tag = 'input window, operand 4, single buffered']
    #allocation11 [shape = 'u8[262144]{0}', space=vmem, size = 0x40000, scoped, tag = 'output window, operand 0']
    %10 = vsyncpa [#allocation4], 0
    %s11 = scalar_lea.sflag [#allocation4], 1
    %12 = vsyncpa %s11, 0
    %13 = vsyncpa [#allocation7], 0
    %14 = vsyncpa [#allocation5], 0
    %s15 = scalar_lea.sflag [#allocation5], 1
    %16 = vsyncpa %s15, 0
    loop: start=0, step=1, limit=10
    $region2: #{tpu_custom_call.1} parent=1 // loop_pre_header
      _
    $region3: #{tpu_custom_call.1} parent=1 // loop_header
      %s18 = sphi 0, %s22
      %p19 = scmp.ge.s32.totalorder %s18, 10
      %s25 = sphi 0, %s44
      %s26 = sphi 0, %s40
      %s27 = sphi 0, %s36
      %s28 = sphi 0, %s25
      %s29 = sphi 0, %s26
      %s30 = sphi 0, %s27
      %s31 = sphi 0, %s28
      %s32 = sphi 0, %s29
      %s33 = sphi 0, %s30
      %s49 = sphi 0, %s51
      %s52 = sphi 0, %s49
      %s53 = sphi 0, %s52
      %s69 = sphi 0, %s53
      %s73 = sphi 0, %s73
      %s75 = sphi 0, %s73
      %s76 = sphi 0, %s75
      %s90 = sphi 0, %s76
      %s98 = sphi 0, %s100
      %s101 = sphi 0, %s98
      %s102 = sphi 0, %s101
      %s118 = sphi 0, %s102
      %s124 = sphi 0, %s126
      %s127 = sphi 0, %s124
      %s128 = sphi 0, %s127
      %s144 = sphi 0, %s128
      %s148 = sphi 0, %s148
      %s150 = sphi 0, %s148
      %s151 = sphi 0, %s150
      %s165 = sphi 0, %s151
      %s173 = sphi 0, %s175
      %s176 = sphi 0, %s173
      %s177 = sphi 0, %s176
      %s193 = sphi 0, %s177
    $region4: #{tpu_custom_call.1} parent=1 // loop_header_branch
      %21 = sbr.rel (%p19) target = $region8
    $region5: #{tpu_custom_call.1} parent=1 // loop_body
      %s23 = ssub.s32 %s18, 1
      %s24 = ssub.s32 %s18, 2
      %s34 = sadd.s32 1, %s27
      %p35 = scmp.ge.s32.totalorder %s34, 2
      %s36 = scalar_select %p35, 0, %s34
      %s37 = sadd.s32 1, %s26
      %s38 = scalar_select %p35, %s37, %s26
      %p39 = scmp.ge.s32.totalorder %s38, 2
      %s40 = scalar_select %p39, 0, %s38
      %s41 = sadd.s32 1, %s25
      %s42 = scalar_select %p39, %s41, %s25
      %p43 = scmp.ge.s32.totalorder %s42, 2
      %s44 = scalar_select %p43, 0, %s42
      %s45 = ssub.s32 %s25, %s44
      %s46 = ssub.s32 %s27, %s36
      %s47 = sor.u32 %s45, %s46
      %p48 = scmp.eq.s32.totalorder %s47, 0
      %s50 = sadd.s32 %s49, 1
      %s51 = scalar_select %p48, %s49, %s50
      %p54 = pneg %p48
      %p55 = scmp.eq.s32.totalorder %s18, 7
      %p56 = por %p54, %p55
      %p57 = scmp.ne.s32.totalorder %s49, %s52
      %p58 = scmp.eq.s32.totalorder %s18, 0
      %p59 = por %p57, %p58
      %p60 = scmp.ne.s32.totalorder %s49, %s52
      %p61 = scmp.eq.s32.totalorder %s23, 7
      %p62 = por %p60, %p61
      %p63 = scmp.ne.s32.totalorder %s52, %s53
      %p64 = scmp.eq.s32.totalorder %s23, 0
      %p65 = por %p63, %p64
      %p66 = scmp.ne.s32.totalorder %s52, %s53
      %p67 = scmp.eq.s32.totalorder %s24, 7
      %p68 = por %p66, %p67
      %p70 = scmp.ne.s32.totalorder %s53, %s69
      %p71 = scmp.eq.s32.totalorder %s24, 0
      %p72 = por %p70, %p71
      %s74 = sadd.s32 %s73, 1
      %p77 = scmp.eq.s32.totalorder %s18, 7
      %p78 = scmp.ne.s32.totalorder %s73, %s75
      %p79 = scmp.eq.s32.totalorder %s18, 0
      %p80 = por %p78, %p79
      %p81 = scmp.ne.s32.totalorder %s73, %s75
      %p82 = scmp.eq.s32.totalorder %s23, 7
      %p83 = por %p81, %p82
      %p84 = scmp.ne.s32.totalorder %s75, %s76
      %p85 = scmp.eq.s32.totalorder %s23, 0
      %p86 = por %p84, %p85
      %p87 = scmp.ne.s32.totalorder %s75, %s76
      %p88 = scmp.eq.s32.totalorder %s24, 7
      %p89 = por %p87, %p88
      %p91 = scmp.ne.s32.totalorder %s76, %s90
      %p92 = scmp.eq.s32.totalorder %s24, 0
      %p93 = por %p91, %p92
      %s94 = ssub.s32 %s26, %s40
      %s95 = ssub.s32 %s27, %s36
      %s96 = sor.u32 %s94, %s95
      %p97 = scmp.eq.s32.totalorder %s96, 0
      %s99 = sadd.s32 %s98, 1
      %s100 = scalar_select %p97, %s98, %s99
      %p103 = pneg %p97
      %p104 = scmp.eq.s32.totalorder %s18, 7
      %p105 = por %p103, %p104
      %p106 = scmp.ne.s32.totalorder %s98, %s101
      %p107 = scmp.eq.s32.totalorder %s18, 0
      %p108 = por %p106, %p107
      %p109 = scmp.ne.s32.totalorder %s98, %s101
      %p110 = scmp.eq.s32.totalorder %s23, 7
      %p111 = por %p109, %p110
      %p112 = scmp.ne.s32.totalorder %s101, %s102
      %p113 = scmp.eq.s32.totalorder %s23, 0
      %p114 = por %p112, %p113
      %p115 = scmp.ne.s32.totalorder %s101, %s102
      %p116 = scmp.eq.s32.totalorder %s24, 7
      %p117 = por %p115, %p116
      %p119 = scmp.ne.s32.totalorder %s102, %s118
      %p120 = scmp.eq.s32.totalorder %s24, 0
      %p121 = por %p119, %p120
      %s122 = ssub.s32 %s26, %s40
      %p123 = scmp.eq.s32.totalorder %s122, 0
      %s125 = sadd.s32 %s124, 1
      %s126 = scalar_select %p123, %s124, %s125
      %p129 = pneg %p123
      %p130 = scmp.eq.s32.totalorder %s18, 7
      %p131 = por %p129, %p130
      %p132 = scmp.ne.s32.totalorder %s124, %s127
      %p133 = scmp.eq.s32.totalorder %s18, 0
      %p134 = por %p132, %p133
      %p135 = scmp.ne.s32.totalorder %s124, %s127
      %p136 = scmp.eq.s32.totalorder %s23, 7
      %p137 = por %p135, %p136
      %p138 = scmp.ne.s32.totalorder %s127, %s128
      %p139 = scmp.eq.s32.totalorder %s23, 0
      %p140 = por %p138, %p139
      %p141 = scmp.ne.s32.totalorder %s127, %s128
      %p142 = scmp.eq.s32.totalorder %s24, 7
      %p143 = por %p141, %p142
      %p145 = scmp.ne.s32.totalorder %s128, %s144
      %p146 = scmp.eq.s32.totalorder %s24, 0
      %p147 = por %p145, %p146
      %s149 = sadd.s32 %s148, 1
      %p152 = scmp.eq.s32.totalorder %s18, 7
      %p153 = scmp.ne.s32.totalorder %s148, %s150
      %p154 = scmp.eq.s32.totalorder %s18, 0
      %p155 = por %p153, %p154
      %p156 = scmp.ne.s32.totalorder %s148, %s150
      %p157 = scmp.eq.s32.totalorder %s23, 7
      %p158 = por %p156, %p157
      %p159 = scmp.ne.s32.totalorder %s150, %s151
      %p160 = scmp.eq.s32.totalorder %s23, 0
      %p161 = por %p159, %p160
      %p162 = scmp.ne.s32.totalorder %s150, %s151
      %p163 = scmp.eq.s32.totalorder %s24, 7
      %p164 = por %p162, %p163
      %p166 = scmp.ne.s32.totalorder %s151, %s165
      %p167 = scmp.eq.s32.totalorder %s24, 0
      %p168 = por %p166, %p167
      %s169 = ssub.s32 %s25, %s44
      %s170 = ssub.s32 %s26, %s40
      %s171 = sor.u32 %s169, %s170
      %p172 = scmp.eq.s32.totalorder %s171, 0
      %s174 = sadd.s32 %s173, 1
      %s175 = scalar_select %p172, %s173, %s174
      %p178 = pneg %p172
      %p179 = scmp.eq.s32.totalorder %s18, 7
      %p180 = por %p178, %p179
      %p181 = scmp.ne.s32.totalorder %s173, %s176
      %p182 = scmp.eq.s32.totalorder %s18, 0
      %p183 = por %p181, %p182
      %p184 = scmp.ne.s32.totalorder %s173, %s176
      %p185 = scmp.eq.s32.totalorder %s23, 7
      %p186 = por %p184, %p185
      %p187 = scmp.ne.s32.totalorder %s176, %s177
      %p188 = scmp.eq.s32.totalorder %s23, 0
      %p189 = por %p187, %p188
      %p190 = scmp.ne.s32.totalorder %s176, %s177
      %p191 = scmp.eq.s32.totalorder %s24, 7
      %p192 = por %p190, %p191
      %p194 = scmp.ne.s32.totalorder %s177, %s193
      %p195 = scmp.eq.s32.totalorder %s24, 0
      %p196 = por %p194, %p195
      %p197 = scmp.le.s32.totalorder 1, %s18
      %p198 = scmp.lt.s32.totalorder %s18, 9
      %p199 = pnand %p197, %p198
      %p200 = pneg %p199
      // Predicated region
      $region9: #{tpu_custom_call.1} parent=5 // pred_check
        _
      $region10: #{tpu_custom_call.1} parent=5 // pred_check_branch
        %202 = sbr.rel (%p199) target = $region12
      $region11: #{tpu_custom_call.1} parent=5 // pred_region
        %s203 = ssub.s32 %s18, 1
        // Predicated region
        $region13: #{tpu_custom_call.1} parent=11 // pred_check
          %p204 = pneg %p86
        $region14: #{tpu_custom_call.1} parent=11 // pred_check_branch
          %206 = sbr.rel (%p204) target = $region16
        $region15: #{tpu_custom_call.1} parent=11 // pred_region
          %s208 = ssub.s32 2048, 2048
          %209 = vsyncadd [#allocation7], %s208
          %s210 = sshll.u32 [#allocation6], 4
          %s211 = int_to_ptr.vmem [resolvable:$true] %s210
          %216 = dma.hbm_to_vmem [thread:$0]  %s1, 2048, %s211, [#allocation7], 64, 64, 4
        $region16: #{tpu_custom_call.1} parent=11 // pred_fallthru
          _
        // Predicated region
        $region17: #{tpu_custom_call.1} parent=11 // pred_check
          %p217 = pneg %p161
        $region18: #{tpu_custom_call.1} parent=11 // pred_check_branch
          %219 = sbr.rel (%p217) target = $region20
        $region19: #{tpu_custom_call.1} parent=11 // pred_region
          %s221 = ssub.s32 2048, 2048
          %222 = vsyncadd [#allocation7], %s221
          %s223 = sshll.u32 [#allocation10], 4
          %s224 = int_to_ptr.vmem [resolvable:$true] %s223
          %229 = dma.hbm_to_vmem [thread:$0]  %s4, 2048, %s224, [#allocation7], 128, 128, 8
        $region20: #{tpu_custom_call.1} parent=11 // pred_fallthru
          _
      $region12: #{tpu_custom_call.1} parent=5 // pred_fallthru
        _
      %p230 = scmp.lt.s32.totalorder %s18, 8
      // Predicated region
      $region21: #{tpu_custom_call.1} parent=5 // pred_check
        %p231 = pneg %p230
      $region22: #{tpu_custom_call.1} parent=5 // pred_check_branch
        %233 = sbr.rel (%p231) target = $region24
      $region23: #{tpu_custom_call.1} parent=5 // pred_region
        // Predicated region
        $region25: #{tpu_custom_call.1} parent=23 // pred_check
          %p234 = pneg %p59
        $region26: #{tpu_custom_call.1} parent=23 // pred_check_branch
          %236 = sbr.rel (%p234) target = $region28
        $region27: #{tpu_custom_call.1} parent=23 // pred_region
          %s237 = sand.u32 %s18, 1
          %s238 = scalar_lea.sflag [#allocation4], %s237
          %s239 = sand.u32 %s49, 1
          %s240 = smul.addr %s239, 128
          %s241 = scalar_lea.vmem [#allocation3], %s240
          %s242 = smul.u32 16, %s27
          %s244 = ssub.s32 2048, 2048
          %245 = vsyncadd %s238, %s244
          %s246 = smul.addr %s242, 2
          %s247 = smul.addr %s25, 64
          %s248 = sadd.s32 %s246, %s247
          %s249 = smul.addr %s248, 64
          %s250 = scalar_lea.hbm %s0, %s249
          %s251 = sshll.u32 %s241, 4
          %s252 = int_to_ptr.vmem [resolvable:$true] %s251
          %257 = dma.hbm_to_vmem [thread:$0]  %s250, 2048, %s252, %s238, 128, 128, 8
        $region28: #{tpu_custom_call.1} parent=23 // pred_fallthru
          _
        // Predicated region
        $region29: #{tpu_custom_call.1} parent=23 // pred_check
          %p258 = pneg %p108
        $region30: #{tpu_custom_call.1} parent=23 // pred_check_branch
          %260 = sbr.rel (%p258) target = $region32
        $region31: #{tpu_custom_call.1} parent=23 // pred_region
          %s261 = sand.u32 %s18, 1
          %s262 = scalar_lea.sflag [#allocation4], %s261
          %s263 = sand.u32 %s98, 1
          %s264 = smul.addr %s263, 64
          %s265 = scalar_lea.vmem [#allocation8], %s264
          %s266 = smul.u32 16, %s26
          %s268 = ssub.s32 1024, 1024
          %269 = vsyncadd %s262, %s268
          %s270 = smul.addr %s266, 2
          %s271 = sadd.s32 %s27, %s270
          %s272 = smul.addr %s271, 64
          %s273 = scalar_lea.hbm %s2, %s272
          %s274 = sshll.u32 %s265, 4
          %s275 = int_to_ptr.vmem [resolvable:$true] %s274
          %280 = dma.hbm_to_vmem [thread:$0]  %s273, 1024, %s275, %s262, 128, 64, 4
        $region32: #{tpu_custom_call.1} parent=23 // pred_fallthru
          _
        // Predicated region
        $region33: #{tpu_custom_call.1} parent=23 // pred_check
          %p281 = pneg %p134
        $region34: #{tpu_custom_call.1} parent=23 // pred_check_branch
          %283 = sbr.rel (%p281) target = $region36
        $region35: #{tpu_custom_call.1} parent=23 // pred_region
          %s284 = sand.u32 %s18, 1
          %s285 = scalar_lea.sflag [#allocation4], %s284
          %s286 = sand.u32 %s124, 1
          %s287 = smul.addr %s286, 128
          %s288 = scalar_lea.vmem [#allocation9], %s287
          %s289 = smul.u32 16, %s26
          %s291 = ssub.s32 2048, 2048
          %292 = vsyncadd %s285, %s291
          %s293 = smul.addr %s289, 128
          %s294 = scalar_lea.hbm %s3, %s293
          %s295 = sshll.u32 %s288, 4
          %s296 = int_to_ptr.vmem [resolvable:$true] %s295
          %301 = dma.hbm_to_vmem [thread:$0]  %s294, 2048, %s296, %s285, 128, 128, 8
        $region36: #{tpu_custom_call.1} parent=23 // pred_fallthru
          _
      $region24: #{tpu_custom_call.1} parent=5 // pred_fallthru
        _
      %p302 = scmp.le.s32.totalorder 1, %s18
      %p303 = scmp.lt.s32.totalorder %s18, 9
      %p304 = pnand %p302, %p303
      %p305 = pneg %p304
      // Predicated region
      $region37: #{tpu_custom_call.1} parent=5 // pred_check
        _
      $region38: #{tpu_custom_call.1} parent=5 // pred_check_branch
        %307 = sbr.rel (%p304) target = $region40
      $region39: #{tpu_custom_call.1} parent=5 // pred_region
        %s308 = ssub.s32 %s18, 1
        %s309 = sand.u32 %s23, 1
        %s310 = scalar_lea.sflag [#allocation4], %s309
        %s311 = sand.u32 %s52, 1
        %s312 = smul.addr %s311, 128
        %s313 = scalar_lea.vmem [#allocation3], %s312
        // Predicated region
        $region41: #{tpu_custom_call.1} parent=39 // pred_check
          %p314 = pneg %p65
        $region42: #{tpu_custom_call.1} parent=39 // pred_check_branch
          %316 = sbr.rel (%p314) target = $region44
        $region43: #{tpu_custom_call.1} parent=39 // pred_region
          %317 = dma.done %s310, 2048
        $region44: #{tpu_custom_call.1} parent=39 // pred_fallthru
          _
        // Predicated region
        $region45: #{tpu_custom_call.1} parent=39 // pred_check
          %p318 = pneg %p86
        $region46: #{tpu_custom_call.1} parent=39 // pred_check_branch
          %320 = sbr.rel (%p318) target = $region48
        $region47: #{tpu_custom_call.1} parent=39 // pred_region
          %321 = dma.done [#allocation7], 2048
        $region48: #{tpu_custom_call.1} parent=39 // pred_fallthru
          _
        %s322 = sand.u32 %s23, 1
        %s323 = scalar_lea.sflag [#allocation4], %s322
        %s324 = sand.u32 %s101, 1
        %s325 = smul.addr %s324, 64
        %s326 = scalar_lea.vmem [#allocation8], %s325
        // Predicated region
        $region49: #{tpu_custom_call.1} parent=39 // pred_check
          %p327 = pneg %p114
        $region50: #{tpu_custom_call.1} parent=39 // pred_check_branch
          %329 = sbr.rel (%p327) target = $region52
        $region51: #{tpu_custom_call.1} parent=39 // pred_region
          %330 = dma.done %s323, 1024
        $region52: #{tpu_custom_call.1} parent=39 // pred_fallthru
          _
        %s331 = sand.u32 %s23, 1
        %s332 = scalar_lea.sflag [#allocation4], %s331
        %s333 = sand.u32 %s127, 1
        %s334 = smul.addr %s333, 128
        %s335 = scalar_lea.vmem [#allocation9], %s334
        // Predicated region
        $region53: #{tpu_custom_call.1} parent=39 // pred_check
          %p336 = pneg %p140
        $region54: #{tpu_custom_call.1} parent=39 // pred_check_branch
          %338 = sbr.rel (%p336) target = $region56
        $region55: #{tpu_custom_call.1} parent=39 // pred_region
          %339 = dma.done %s332, 2048
        $region56: #{tpu_custom_call.1} parent=39 // pred_fallthru
          _
        // Predicated region
        $region57: #{tpu_custom_call.1} parent=39 // pred_check
          %p340 = pneg %p161
        $region58: #{tpu_custom_call.1} parent=39 // pred_check_branch
          %342 = sbr.rel (%p340) target = $region60
        $region59: #{tpu_custom_call.1} parent=39 // pred_region
          %343 = dma.done [#allocation7], 2048
        $region60: #{tpu_custom_call.1} parent=39 // pred_fallthru
          _
        %s344 = sand.u32 %s23, 1
        %s345 = scalar_lea.sflag [#allocation4], %s344
        %s346 = sand.u32 %s52, 1
        %s347 = smul.addr %s346, 128
        %s348 = scalar_lea.vmem [#allocation3], %s347
        %p349 = pneg %p65
        %p350 = pneg %p62
        %p351 = pneg %p86
        %p352 = pneg %p83
        %s353 = sand.u32 %s23, 1
        %s354 = scalar_lea.sflag [#allocation4], %s353
        %s355 = sand.u32 %s101, 1
        %s356 = smul.addr %s355, 64
        %s357 = scalar_lea.vmem [#allocation8], %s356
        %p358 = pneg %p114
        %p359 = pneg %p111
        %s360 = sand.u32 %s23, 1
        %s361 = scalar_lea.sflag [#allocation4], %s360
        %s362 = sand.u32 %s127, 1
        %s363 = smul.addr %s362, 128
        %s364 = scalar_lea.vmem [#allocation9], %s363
        %p365 = pneg %p140
        %p366 = pneg %p137
        %p367 = pneg %p161
        %p368 = pneg %p158
        %p369 = pneg %p189
        %p370 = pneg %p186
        %s371 = sand.u32 %s176, 1
        %s372 = scalar_lea.sflag [#allocation5], %s371
        %s373 = sand.u32 %s176, 1
        %s374 = smul.addr %s373, 256
        %s375 = scalar_lea.vmem [#allocation11], %s374
        %s376 = smul.u32 16, %s30
        %s377 = smul.u32 16, %s29
        %s378 = smul.u32 16, %s29
        %s379 = smul.u32 16, %s29
        %p381 = scmp.eq.s32.totalorder %s30, 0
        // Predicated region
        $region61: #{tpu_custom_call.1} parent=39 // pred_check
          %p382 = pneg %p381
        $region62: #{tpu_custom_call.1} parent=39 // pred_check_branch
          %384 = sbr.rel (%p382) target = $region64
        $region63: #{tpu_custom_call.1} parent=39 // pred_region
          %385 = vst [vmem:[#allocation2] sm:$0xff] 0.0
          %386 = vst [vmem:[#allocation2 + $0x8] sm:$0xff] 0.0
          %387 = vst [vmem:[#allocation2 + $0x10] sm:$0xff] 0.0
          %388 = vst [vmem:[#allocation2 + $0x18] sm:$0xff] 0.0
          %389 = vst [vmem:[#allocation2 + $0x20] sm:$0xff] 0.0
          %390 = vst [vmem:[#allocation2 + $0x28] sm:$0xff] 0.0
          %391 = vst [vmem:[#allocation2 + $0x30] sm:$0xff] 0.0
          %392 = vst [vmem:[#allocation2 + $0x38] sm:$0xff] 0.0
          %393 = vst [vmem:[#allocation2 + $0x40] sm:$0xff] 0.0
          %394 = vst [vmem:[#allocation2 + $0x48] sm:$0xff] 0.0
          %395 = vst [vmem:[#allocation2 + $0x50] sm:$0xff] 0.0
          %396 = vst [vmem:[#allocation2 + $0x58] sm:$0xff] 0.0
          %397 = vst [vmem:[#allocation2 + $0x60] sm:$0xff] 0.0
          %398 = vst [vmem:[#allocation2 + $0x68] sm:$0xff] 0.0
          %399 = vst [vmem:[#allocation2 + $0x70] sm:$0xff] 0.0
          %400 = vst [vmem:[#allocation2 + $0x78] sm:$0xff] 0.0
        $region64: #{tpu_custom_call.1} parent=39 // pred_fallthru
          _
        %v401 = vld [vmem:[%s313] sm:$0xff]
        %v402 = vld [vmem:[%s313 + $0x8] sm:$0xff]
        %v403 = vld [vmem:[%s313 + $0x10] sm:$0xff]
        %v404 = vld [vmem:[%s313 + $0x18] sm:$0xff]
        %v405 = vld [vmem:[%s313 + $0x20] sm:$0xff]
        %v406 = vld [vmem:[%s313 + $0x28] sm:$0xff]
        %v407 = vld [vmem:[%s313 + $0x30] sm:$0xff]
        %v408 = vld [vmem:[%s313 + $0x38] sm:$0xff]
        %v409 = vld [vmem:[%s313 + $0x40] sm:$0xff]
        %v410 = vld [vmem:[%s313 + $0x48] sm:$0xff]
        %v411 = vld [vmem:[%s313 + $0x50] sm:$0xff]
        %v412 = vld [vmem:[%s313 + $0x58] sm:$0xff]
        %v413 = vld [vmem:[%s313 + $0x60] sm:$0xff]
        %v414 = vld [vmem:[%s313 + $0x68] sm:$0xff]
        %v415 = vld [vmem:[%s313 + $0x70] sm:$0xff]
        %v416 = vld [vmem:[%s313 + $0x78] sm:$0xff]
        %v417 = vld [vmem:[#allocation6] sm:$0xf]
        %v418 = vld [vmem:[#allocation6 + $0x4] sm:$0xf]
        %v419 = vld [vmem:[#allocation6 + $0x8] sm:$0xf]
        %v420 = vld [vmem:[#allocation6 + $0xc] sm:$0xf]
        %v421 = vld [vmem:[#allocation6 + $0x10] sm:$0xf]
        %v422 = vld [vmem:[#allocation6 + $0x14] sm:$0xf]
        %v423 = vld [vmem:[#allocation6 + $0x18] sm:$0xf]
        %v424 = vld [vmem:[#allocation6 + $0x1c] sm:$0xf]
        %v425 = vld [vmem:[#allocation6 + $0x20] sm:$0xf]
        %v426 = vld [vmem:[#allocation6 + $0x24] sm:$0xf]
        %v427 = vld [vmem:[#allocation6 + $0x28] sm:$0xf]
        %v428 = vld [vmem:[#allocation6 + $0x2c] sm:$0xf]
        %v429 = vld [vmem:[#allocation6 + $0x30] sm:$0xf]
        %v430 = vld [vmem:[#allocation6 + $0x34] sm:$0xf]
        %v431 = vld [vmem:[#allocation6 + $0x38] sm:$0xf]
        %v432 = vld [vmem:[#allocation6 + $0x3c] sm:$0xf]
        %v433 = vld [vmem:[#allocation6 + $0x40] sm:$0xf]
        %v434 = vld [vmem:[#allocation6 + $0x44] sm:$0xf]
        %v435 = vld [vmem:[#allocation6 + $0x48] sm:$0xf]
        %v436 = vld [vmem:[#allocation6 + $0x4c] sm:$0xf]
        %v437 = vld [vmem:[#allocation6 + $0x50] sm:$0xf]
        %v438 = vld [vmem:[#allocation6 + $0x54] sm:$0xf]
        %v439 = vld [vmem:[#allocation6 + $0x58] sm:$0xf]
        %v440 = vld [vmem:[#allocation6 + $0x5c] sm:$0xf]
        %v441 = vld [vmem:[#allocation6 + $0x60] sm:$0xf]
        %v442 = vld [vmem:[#allocation6 + $0x64] sm:$0xf]
        %v443 = vld [vmem:[#allocation6 + $0x68] sm:$0xf]
        %v444 = vld [vmem:[#allocation6 + $0x6c] sm:$0xf]
        %v445 = vld [vmem:[#allocation6 + $0x70] sm:$0xf]
        %v446 = vld [vmem:[#allocation6 + $0x74] sm:$0xf]
        %v447 = vld [vmem:[#allocation6 + $0x78] sm:$0xf]
        %v448 = vld [vmem:[#allocation6 + $0x7c] sm:$0xf]
        %v465 = vunpack.c.l.b16 %v401
        %v466 = vunpack.c.h.b16 %v401
        %v467 = vunpack.c.l.b16 %v402
        %v468 = vunpack.c.h.b16 %v402
        %v469 = vunpack.c.l.b16 %v403
        %v470 = vunpack.c.h.b16 %v403
        %v471 = vunpack.c.l.b16 %v404
        %v472 = vunpack.c.h.b16 %v404
        %v473 = vunpack.c.l.b16 %v405
        %v474 = vunpack.c.h.b16 %v405
        %v475 = vunpack.c.l.b16 %v406
        %v476 = vunpack.c.h.b16 %v406
        %v477 = vunpack.c.l.b16 %v407
        %v478 = vunpack.c.h.b16 %v407
        %v479 = vunpack.c.l.b16 %v408
        %v480 = vunpack.c.h.b16 %v408
        %v481 = vunpack.c.l.b16 %v409
        %v482 = vunpack.c.h.b16 %v409
        %v483 = vunpack.c.l.b16 %v410
        %v484 = vunpack.c.h.b16 %v410
        %v485 = vunpack.c.l.b16 %v411
        %v486 = vunpack.c.h.b16 %v411
        %v487 = vunpack.c.l.b16 %v412
        %v488 = vunpack.c.h.b16 %v412
        %v489 = vunpack.c.l.b16 %v413
        %v490 = vunpack.c.h.b16 %v413
        %v491 = vunpack.c.l.b16 %v414
        %v492 = vunpack.c.h.b16 %v414
        %v493 = vunpack.c.l.b16 %v415
        %v494 = vunpack.c.h.b16 %v415
        %v495 = vunpack.c.l.b16 %v416
        %v496 = vunpack.c.h.b16 %v416
        %v497 = vpack.c.b16 %v467, %v465
        %v498 = vpack.c.b16 %v468, %v466
        %v499 = vpack.c.b16 %v471, %v469
        %v500 = vpack.c.b16 %v472, %v470
        %v501 = vpack.c.b16 %v475, %v473
        %v502 = vpack.c.b16 %v476, %v474
        %v503 = vpack.c.b16 %v479, %v477
        %v504 = vpack.c.b16 %v480, %v478
        %v505 = vpack.c.b16 %v483, %v481
        %v506 = vpack.c.b16 %v484, %v482
        %v507 = vpack.c.b16 %v487, %v485
        %v508 = vpack.c.b16 %v488, %v486
        %v509 = vpack.c.b16 %v491, %v489
        %v510 = vpack.c.b16 %v492, %v490
        %v511 = vpack.c.b16 %v495, %v493
        %v512 = vpack.c.b16 %v496, %v494
        %v561 = vunpack.c.l.b16 %v417
        %v562 = vunpack.c.l.b16 %v418
        %v563 = vunpack.c.l.b16 %v419
        %v564 = vunpack.c.l.b16 %v420
        %v565 = vunpack.c.l.b16 %v421
        %v566 = vunpack.c.l.b16 %v422
        %v567 = vunpack.c.l.b16 %v423
        %v568 = vunpack.c.l.b16 %v424
        %v569 = vunpack.c.l.b16 %v425
        %v570 = vunpack.c.l.b16 %v426
        %v571 = vunpack.c.l.b16 %v427
        %v572 = vunpack.c.l.b16 %v428
        %v573 = vunpack.c.l.b16 %v429
        %v574 = vunpack.c.l.b16 %v430
        %v575 = vunpack.c.l.b16 %v431
        %v576 = vunpack.c.l.b16 %v432
        %v577 = vunpack.c.l.b16 %v433
        %v578 = vunpack.c.l.b16 %v434
        %v579 = vunpack.c.l.b16 %v435
        %v580 = vunpack.c.l.b16 %v436
        %v581 = vunpack.c.l.b16 %v437
        %v582 = vunpack.c.l.b16 %v438
        %v583 = vunpack.c.l.b16 %v439
        %v584 = vunpack.c.l.b16 %v440
        %v585 = vunpack.c.l.b16 %v441
        %v586 = vunpack.c.l.b16 %v442
        %v587 = vunpack.c.l.b16 %v443
        %v588 = vunpack.c.l.b16 %v444
        %v589 = vunpack.c.l.b16 %v445
        %v590 = vunpack.c.l.b16 %v446
        %v591 = vunpack.c.l.b16 %v447
        %v592 = vunpack.c.l.b16 %v448
        %v593 = vpack.c.b16 %v562, %v561
        %v594 = vpack.c.b16 %v564, %v563
        %v595 = vpack.c.b16 %v566, %v565
        %v596 = vpack.c.b16 %v568, %v567
        %v597 = vpack.c.b16 %v570, %v569
        %v598 = vpack.c.b16 %v572, %v571
        %v599 = vpack.c.b16 %v574, %v573
        %v600 = vpack.c.b16 %v576, %v575
        %v601 = vpack.c.b16 %v578, %v577
        %v602 = vpack.c.b16 %v580, %v579
        %v603 = vpack.c.b16 %v582, %v581
        %v604 = vpack.c.b16 %v584, %v583
        %v605 = vpack.c.b16 %v586, %v585
        %v606 = vpack.c.b16 %v588, %v587
        %v607 = vpack.c.b16 %v590, %v589
        %v608 = vpack.c.b16 %v592, %v591
        %625 = vmatprep.subr.bf16.mxu0 0
        %626 = vmatpush1.bf16.msra.mxu0 %v600
        %627 = vmatprep.subr.bf16.mxu0 0
        %628 = vmatpush1.bf16.msra.mxu0 %v599
        %629 = vmatprep.subr.bf16.mxu0 0
        %630 = vmatpush1.bf16.msra.mxu0 %v598
        %631 = vmatprep.subr.bf16.mxu0 0
        %632 = vmatpush1.bf16.msra.mxu0 %v597
        %633 = vmatprep.subr.bf16.mxu0 0
        %634 = vmatpush1.bf16.msra.mxu0 %v596
        %635 = vmatprep.subr.bf16.mxu0 0
        %636 = vmatpush1.bf16.msra.mxu0 %v595
        %637 = vmatprep.subr.bf16.mxu0 0
        %638 = vmatpush1.bf16.msra.mxu0 %v594
        %639 = vmatprep.subr.bf16.mxu0 0
        %640 = vmatpush1.bf16.msra.mxu0 %v593
        %641 = vmatprep.subr.bf16.mxu0 0
        %642 = vmatpush2.bf16.msra.mxu0 %v608
        %643 = vmatprep.subr.bf16.mxu0 0
        %644 = vmatpush2.bf16.msra.mxu0 %v607
        %645 = vmatprep.subr.bf16.mxu0 0
        %646 = vmatpush2.bf16.msra.mxu0 %v606
        %647 = vmatprep.subr.bf16.mxu0 0
        %648 = vmatpush2.bf16.msra.mxu0 %v605
        %649 = vmatprep.subr.bf16.mxu0 0
        %650 = vmatpush2.bf16.msra.mxu0 %v604
        %651 = vmatprep.subr.bf16.mxu0 0
        %652 = vmatpush2.bf16.msra.mxu0 %v603
        %653 = vmatprep.subr.bf16.mxu0 0
        %654 = vmatpush2.bf16.msra.mxu0 %v602
        %655 = vmatprep.subr.bf16.mxu0 0
        %656 = vmatpush2.bf16.msra.mxu0 %v601
        %657 = vmatprep.mubr.bf16.mxu0 %v498
        %658 = vmatmul.mubr.bf16.gmra.mxu0 %v497
        %v659 = vpop.f32.mrf.mxu0
        %v660 = vadd.f32 0.0, %v659
        %v661 = vpop.f32.mrf.mxu0
        %v662 = vpop.f32.mrf.mxu0
        %v663 = vadd.f32 0.0, %v662
        %v664 = vpop.f32.mrf.mxu0
        %665 = vmatprep.mubr.bf16.mxu0 %v500
        %666 = vmatmul.mubr.bf16.gmra.mxu0 %v499
        %v667 = vpop.f32.mrf.mxu0
        %v668 = vadd.f32 0.0, %v667
        %v669 = vpop.f32.mrf.mxu0
        %v670 = vpop.f32.mrf.mxu0
        %v671 = vadd.f32 0.0, %v670
        %v672 = vpop.f32.mrf.mxu0
        %673 = vmatprep.mubr.bf16.mxu0 %v502
        %674 = vmatmul.mubr.bf16.gmra.mxu0 %v501
        %v675 = vpop.f32.mrf.mxu0
        %v676 = vadd.f32 0.0, %v675
        %v677 = vpop.f32.mrf.mxu0
        %v678 = vpop.f32.mrf.mxu0
        %v679 = vadd.f32 0.0, %v678
        %v680 = vpop.f32.mrf.mxu0
        %681 = vmatprep.mubr.bf16.mxu0 %v504
        %682 = vmatmul.mubr.bf16.gmra.mxu0 %v503
        %v683 = vpop.f32.mrf.mxu0
        %v684 = vadd.f32 0.0, %v683
        %v685 = vpop.f32.mrf.mxu0
        %v686 = vpop.f32.mrf.mxu0
        %v687 = vadd.f32 0.0, %v686
        %v688 = vpop.f32.mrf.mxu0
        %689 = vmatprep.mubr.bf16.mxu0 %v506
        %690 = vmatmul.mubr.bf16.gmra.mxu0 %v505
        %v691 = vpop.f32.mrf.mxu0
        %v692 = vadd.f32 0.0, %v691
        %v693 = vpop.f32.mrf.mxu0
        %v694 = vpop.f32.mrf.mxu0
        %v695 = vadd.f32 0.0, %v694
        %v696 = vpop.f32.mrf.mxu0
        %697 = vmatprep.mubr.bf16.mxu0 %v508
        %698 = vmatmul.mubr.bf16.gmra.mxu0 %v507
        %v699 = vpop.f32.mrf.mxu0
        %v700 = vadd.f32 0.0, %v699
        %v701 = vpop.f32.mrf.mxu0
        %v702 = vpop.f32.mrf.mxu0
        %v703 = vadd.f32 0.0, %v702
        %v704 = vpop.f32.mrf.mxu0
        %705 = vmatprep.mubr.bf16.mxu0 %v510
        %706 = vmatmul.mubr.bf16.gmra.mxu0 %v509
        %v707 = vpop.f32.mrf.mxu0
        %v708 = vadd.f32 0.0, %v707
        %v709 = vpop.f32.mrf.mxu0
        %v710 = vpop.f32.mrf.mxu0
        %v711 = vadd.f32 0.0, %v710
        %v712 = vpop.f32.mrf.mxu0
        %713 = vmatprep.mubr.bf16.mxu0 %v512
        %714 = vmatmul.mubr.bf16.gmra.mxu0 %v511
        %v715 = vpop.f32.mrf.mxu0
        %v716 = vadd.f32 0.0, %v715
        %v717 = vpop.f32.mrf.mxu0
        %v718 = vpop.f32.mrf.mxu0
        %v719 = vadd.f32 0.0, %v718
        %v720 = vpop.f32.mrf.mxu0
        %721 = vdwg.mxu0
        %v722 = vld [vmem:[#allocation2] sm:$0xff]
        %v723 = vld [vmem:[#allocation2 + $0x8] sm:$0xff]
        %v724 = vld [vmem:[#allocation2 + $0x10] sm:$0xff]
        %v725 = vld [vmem:[#allocation2 + $0x18] sm:$0xff]
        %v726 = vld [vmem:[#allocation2 + $0x20] sm:$0xff]
        %v727 = vld [vmem:[#allocation2 + $0x28] sm:$0xff]
        %v728 = vld [vmem:[#allocation2 + $0x30] sm:$0xff]
        %v729 = vld [vmem:[#allocation2 + $0x38] sm:$0xff]
        %v730 = vld [vmem:[#allocation2 + $0x40] sm:$0xff]
        %v731 = vld [vmem:[#allocation2 + $0x48] sm:$0xff]
        %v732 = vld [vmem:[#allocation2 + $0x50] sm:$0xff]
        %v733 = vld [vmem:[#allocation2 + $0x58] sm:$0xff]
        %v734 = vld [vmem:[#allocation2 + $0x60] sm:$0xff]
        %v735 = vld [vmem:[#allocation2 + $0x68] sm:$0xff]
        %v736 = vld [vmem:[#allocation2 + $0x70] sm:$0xff]
        %v737 = vld [vmem:[#allocation2 + $0x78] sm:$0xff]
        %v738 = vld [vmem:[%s326] sm:$0xf]
        %v739 = vld [vmem:[%s326 + $0x4] sm:$0xf]
        %v740 = vld [vmem:[%s326 + $0x8] sm:$0xf]
        %v741 = vld [vmem:[%s326 + $0xc] sm:$0xf]
        %v742 = vld [vmem:[%s326 + $0x10] sm:$0xf]
        %v743 = vld [vmem:[%s326 + $0x14] sm:$0xf]
        %v744 = vld [vmem:[%s326 + $0x18] sm:$0xf]
        %v745 = vld [vmem:[%s326 + $0x1c] sm:$0xf]
        %v746 = vld [vmem:[%s326 + $0x20] sm:$0xf]
        %v747 = vld [vmem:[%s326 + $0x24] sm:$0xf]
        %v748 = vld [vmem:[%s326 + $0x28] sm:$0xf]
        %v749 = vld [vmem:[%s326 + $0x2c] sm:$0xf]
        %v750 = vld [vmem:[%s326 + $0x30] sm:$0xf]
        %v751 = vld [vmem:[%s326 + $0x34] sm:$0xf]
        %v752 = vld [vmem:[%s326 + $0x38] sm:$0xf]
        %v753 = vld [vmem:[%s326 + $0x3c] sm:$0xf]
        %v754 = vpack.c.bf16 %v663, %v660
        %v755 = vpack.c.bf16 %v671, %v668
        %v756 = vpack.c.bf16 %v679, %v676
        %v757 = vpack.c.bf16 %v687, %v684
        %v758 = vpack.c.bf16 %v695, %v692
        %v759 = vpack.c.bf16 %v703, %v700
        %v760 = vpack.c.bf16 %v711, %v708
        %v761 = vpack.c.bf16 %v719, %v716
        %v778 = vunpack.c.l.b16 %v738
        %v779 = vunpack.c.l.b16 %v739
        %v780 = vunpack.c.l.b16 %v740
        %v781 = vunpack.c.l.b16 %v741
        %v782 = vunpack.c.l.b16 %v742
        %v783 = vunpack.c.l.b16 %v743
        %v784 = vunpack.c.l.b16 %v744
        %v785 = vunpack.c.l.b16 %v745
        %v786 = vunpack.c.l.b16 %v746
        %v787 = vunpack.c.l.b16 %v747
        %v788 = vunpack.c.l.b16 %v748
        %v789 = vunpack.c.l.b16 %v749
        %v790 = vunpack.c.l.b16 %v750
        %v791 = vunpack.c.l.b16 %v751
        %v792 = vunpack.c.l.b16 %v752
        %v793 = vunpack.c.l.b16 %v753
        %v794 = vpack.c.b16 %v779, %v778
        %v795 = vpack.c.b16 %v781, %v780
        %v796 = vpack.c.b16 %v783, %v782
        %v797 = vpack.c.b16 %v785, %v784
        %v798 = vpack.c.b16 %v787, %v786
        %v799 = vpack.c.b16 %v789, %v788
        %v800 = vpack.c.b16 %v791, %v790
        %v801 = vpack.c.b16 %v793, %v792
        %810 = vmatprep.subr.bf16.mxu0 0
        %811 = vmatpush1.bf16.msra.mxu0 %v761
        %812 = vmatprep.subr.bf16.mxu0 0
        %813 = vmatpush1.bf16.msra.mxu0 %v760
        %814 = vmatprep.subr.bf16.mxu0 0
        %815 = vmatpush1.bf16.msra.mxu0 %v759
        %816 = vmatprep.subr.bf16.mxu0 0
        %817 = vmatpush1.bf16.msra.mxu0 %v758
        %818 = vmatprep.subr.bf16.mxu0 0
        %819 = vmatpush1.bf16.msra.mxu0 %v757
        %820 = vmatprep.subr.bf16.mxu0 0
        %821 = vmatpush1.bf16.msra.mxu0 %v756
        %822 = vmatprep.subr.bf16.mxu0 0
        %823 = vmatpush1.bf16.msra.mxu0 %v755
        %824 = vmatprep.subr.bf16.mxu0 0
        %825 = vmatpush1.bf16.msra.mxu0 %v754
        %826 = vmatprep.subr.bf16.mxu0 0
        %827 = vmatpush2.bf16.msra.mxu0 0
        %828 = vmatprep.subr.bf16.mxu0 0
        %829 = vmatpush2.bf16.msra.mxu0 0
        %830 = vmatprep.subr.bf16.mxu0 0
        %831 = vmatpush2.bf16.msra.mxu0 0
        %832 = vmatprep.subr.bf16.mxu0 0
        %833 = vmatpush2.bf16.msra.mxu0 0
        %834 = vmatprep.subr.bf16.mxu0 0
        %835 = vmatpush2.bf16.msra.mxu0 0
        %836 = vmatprep.subr.bf16.mxu0 0
        %837 = vmatpush2.bf16.msra.mxu0 0
        %838 = vmatprep.subr.bf16.mxu0 0
        %839 = vmatpush2.bf16.msra.mxu0 0
        %840 = vmatprep.subr.bf16.mxu0 0
        %841 = vmatpush2.bf16.msra.mxu0 0
        %842 = vmatprep.mubr.bf16.mxu0 0
        %843 = vmatmul.mubr.bf16.gmra.mxu0 %v794
        %v844 = vpop.f32.mrf.mxu0
        %v845 = vadd.f32 0.0, %v844
        %v846 = vpop.f32.mrf.mxu0
        %v847 = vpop.f32.mrf.mxu0
        %v848 = vadd.f32 0.0, %v847
        %v849 = vpop.f32.mrf.mxu0
        %850 = vmatprep.mubr.bf16.mxu0 0
        %851 = vmatmul.mubr.bf16.gmra.mxu0 %v795
        %v852 = vpop.f32.mrf.mxu0
        %v853 = vadd.f32 0.0, %v852
        %v854 = vpop.f32.mrf.mxu0
        %v855 = vpop.f32.mrf.mxu0
        %v856 = vadd.f32 0.0, %v855
        %v857 = vpop.f32.mrf.mxu0
        %858 = vmatprep.mubr.bf16.mxu0 0
        %859 = vmatmul.mubr.bf16.gmra.mxu0 %v796
        %v860 = vpop.f32.mrf.mxu0
        %v861 = vadd.f32 0.0, %v860
        %v862 = vpop.f32.mrf.mxu0
        %v863 = vpop.f32.mrf.mxu0
        %v864 = vadd.f32 0.0, %v863
        %v865 = vpop.f32.mrf.mxu0
        %866 = vmatprep.mubr.bf16.mxu0 0
        %867 = vmatmul.mubr.bf16.gmra.mxu0 %v797
        %v868 = vpop.f32.mrf.mxu0
        %v869 = vadd.f32 0.0, %v868
        %v870 = vpop.f32.mrf.mxu0
        %v871 = vpop.f32.mrf.mxu0
        %v872 = vadd.f32 0.0, %v871
        %v873 = vpop.f32.mrf.mxu0
        %874 = vmatprep.mubr.bf16.mxu0 0
        %875 = vmatmul.mubr.bf16.gmra.mxu0 %v798
        %v876 = vpop.f32.mrf.mxu0
        %v877 = vadd.f32 0.0, %v876
        %v878 = vpop.f32.mrf.mxu0
        %v879 = vpop.f32.mrf.mxu0
        %v880 = vadd.f32 0.0, %v879
        %v881 = vpop.f32.mrf.mxu0
        %882 = vmatprep.mubr.bf16.mxu0 0
        %883 = vmatmul.mubr.bf16.gmra.mxu0 %v799
        %v884 = vpop.f32.mrf.mxu0
        %v885 = vadd.f32 0.0, %v884
        %v886 = vpop.f32.mrf.mxu0
        %v887 = vpop.f32.mrf.mxu0
        %v888 = vadd.f32 0.0, %v887
        %v889 = vpop.f32.mrf.mxu0
        %890 = vmatprep.mubr.bf16.mxu0 0
        %891 = vmatmul.mubr.bf16.gmra.mxu0 %v800
        %v892 = vpop.f32.mrf.mxu0
        %v893 = vadd.f32 0.0, %v892
        %v894 = vpop.f32.mrf.mxu0
        %v895 = vpop.f32.mrf.mxu0
        %v896 = vadd.f32 0.0, %v895
        %v897 = vpop.f32.mrf.mxu0
        %898 = vmatprep.mubr.bf16.mxu0 0
        %899 = vmatmul.mubr.bf16.gmra.mxu0 %v801
        %v900 = vpop.f32.mrf.mxu0
        %v901 = vadd.f32 0.0, %v900
        %v902 = vpop.f32.mrf.mxu0
        %v903 = vpop.f32.mrf.mxu0
        %v904 = vadd.f32 0.0, %v903
        %v905 = vpop.f32.mrf.mxu0
        %906 = vdwg.mxu0
        %v907 = vadd.f32 %v722, %v845
        %v908 = vadd.f32 %v723, %v848
        %v909 = vadd.f32 %v724, %v853
        %v910 = vadd.f32 %v725, %v856
        %v911 = vadd.f32 %v726, %v861
        %v912 = vadd.f32 %v727, %v864
        %v913 = vadd.f32 %v728, %v869
        %v914 = vadd.f32 %v729, %v872
        %v915 = vadd.f32 %v730, %v877
        %v916 = vadd.f32 %v731, %v880
        %v917 = vadd.f32 %v732, %v885
        %v918 = vadd.f32 %v733, %v888
        %v919 = vadd.f32 %v734, %v893
        %v920 = vadd.f32 %v735, %v896
        %v921 = vadd.f32 %v736, %v901
        %v922 = vadd.f32 %v737, %v904
        %923 = vst [vmem:[#allocation2] sm:$0xff] %v907
        %924 = vst [vmem:[#allocation2 + $0x8] sm:$0xff] %v908
        %925 = vst [vmem:[#allocation2 + $0x10] sm:$0xff] %v909
        %926 = vst [vmem:[#allocation2 + $0x18] sm:$0xff] %v910
        %927 = vst [vmem:[#allocation2 + $0x20] sm:$0xff] %v911
        %928 = vst [vmem:[#allocation2 + $0x28] sm:$0xff] %v912
        %929 = vst [vmem:[#allocation2 + $0x30] sm:$0xff] %v913
        %930 = vst [vmem:[#allocation2 + $0x38] sm:$0xff] %v914
        %931 = vst [vmem:[#allocation2 + $0x40] sm:$0xff] %v915
        %932 = vst [vmem:[#allocation2 + $0x48] sm:$0xff] %v916
        %933 = vst [vmem:[#allocation2 + $0x50] sm:$0xff] %v917
        %934 = vst [vmem:[#allocation2 + $0x58] sm:$0xff] %v918
        %935 = vst [vmem:[#allocation2 + $0x60] sm:$0xff] %v919
        %936 = vst [vmem:[#allocation2 + $0x68] sm:$0xff] %v920
        %937 = vst [vmem:[#allocation2 + $0x70] sm:$0xff] %v921
        %938 = vst [vmem:[#allocation2 + $0x78] sm:$0xff] %v922
        %p939 = scmp.eq.s32.totalorder %s30, 1
        // Predicated region
        $region65: #{tpu_custom_call.1} parent=39 // pred_check
          %p940 = pneg %p939
        $region66: #{tpu_custom_call.1} parent=39 // pred_check_branch
          %942 = sbr.rel (%p940) target = $region68
        $region67: #{tpu_custom_call.1} parent=39 // pred_region
          %v943 = vld [vmem:[#allocation2] sm:$0xff]
          %v944 = vld [vmem:[#allocation2 + $0x8] sm:$0xff]
          %v945 = vld [vmem:[#allocation2 + $0x10] sm:$0xff]
          %v946 = vld [vmem:[#allocation2 + $0x18] sm:$0xff]
          %v947 = vld [vmem:[#allocation2 + $0x20] sm:$0xff]
          %v948 = vld [vmem:[#allocation2 + $0x28] sm:$0xff]
          %v949 = vld [vmem:[#allocation2 + $0x30] sm:$0xff]
          %v950 = vld [vmem:[#allocation2 + $0x38] sm:$0xff]
          %v951 = vld [vmem:[#allocation2 + $0x40] sm:$0xff]
          %v952 = vld [vmem:[#allocation2 + $0x48] sm:$0xff]
          %v953 = vld [vmem:[#allocation2 + $0x50] sm:$0xff]
          %v954 = vld [vmem:[#allocation2 + $0x58] sm:$0xff]
          %v955 = vld [vmem:[#allocation2 + $0x60] sm:$0xff]
          %v956 = vld [vmem:[#allocation2 + $0x68] sm:$0xff]
          %v957 = vld [vmem:[#allocation2 + $0x70] sm:$0xff]
          %v958 = vld [vmem:[#allocation2 + $0x78] sm:$0xff]
          %v959 = vld [vmem:[%s335] sm:$0xff]
          %v960 = vld [vmem:[%s335 + $0x8] sm:$0xff]
          %v961 = vld [vmem:[%s335 + $0x10] sm:$0xff]
          %v962 = vld [vmem:[%s335 + $0x18] sm:$0xff]
          %v963 = vld [vmem:[%s335 + $0x20] sm:$0xff]
          %v964 = vld [vmem:[%s335 + $0x28] sm:$0xff]
          %v965 = vld [vmem:[%s335 + $0x30] sm:$0xff]
          %v966 = vld [vmem:[%s335 + $0x38] sm:$0xff]
          %v967 = vld [vmem:[%s335 + $0x40] sm:$0xff]
          %v968 = vld [vmem:[%s335 + $0x48] sm:$0xff]
          %v969 = vld [vmem:[%s335 + $0x50] sm:$0xff]
          %v970 = vld [vmem:[%s335 + $0x58] sm:$0xff]
          %v971 = vld [vmem:[%s335 + $0x60] sm:$0xff]
          %v972 = vld [vmem:[%s335 + $0x68] sm:$0xff]
          %v973 = vld [vmem:[%s335 + $0x70] sm:$0xff]
          %v974 = vld [vmem:[%s335 + $0x78] sm:$0xff]
          %v975 = vadd.f32 %v943, %v959
          %v976 = vadd.f32 %v944, %v960
          %v977 = vadd.f32 %v945, %v961
          %v978 = vadd.f32 %v946, %v962
          %v979 = vadd.f32 %v947, %v963
          %v980 = vadd.f32 %v948, %v964
          %v981 = vadd.f32 %v949, %v965
          %v982 = vadd.f32 %v950, %v966
          %v983 = vadd.f32 %v951, %v967
          %v984 = vadd.f32 %v952, %v968
          %v985 = vadd.f32 %v953, %v969
          %v986 = vadd.f32 %v954, %v970
          %v987 = vadd.f32 %v955, %v971
          %v988 = vadd.f32 %v956, %v972
          %v989 = vadd.f32 %v957, %v973
          %v990 = vadd.f32 %v958, %v974
          %v991 = vmax.f32 %v975, 0.0
          %v992 = vmax.f32 %v976, 0.0
          %v993 = vmax.f32 %v977, 0.0
          %v994 = vmax.f32 %v978, 0.0
          %v995 = vmax.f32 %v979, 0.0
          %v996 = vmax.f32 %v980, 0.0
          %v997 = vmax.f32 %v981, 0.0
          %v998 = vmax.f32 %v982, 0.0
          %v999 = vmax.f32 %v983, 0.0
          %v1000 = vmax.f32 %v984, 0.0
          %v1001 = vmax.f32 %v985, 0.0
          %v1002 = vmax.f32 %v986, 0.0
          %v1003 = vmax.f32 %v987, 0.0
          %v1004 = vmax.f32 %v988, 0.0
          %v1005 = vmax.f32 %v989, 0.0
          %v1006 = vmax.f32 %v990, 0.0
          %v1007 = vpack.c.bf16 %v992, %v991
          %v1008 = vpack.c.bf16 %v994, %v993
          %v1009 = vpack.c.bf16 %v996, %v995
          %v1010 = vpack.c.bf16 %v998, %v997
          %v1011 = vpack.c.bf16 %v1000, %v999
          %v1012 = vpack.c.bf16 %v1002, %v1001
          %v1013 = vpack.c.bf16 %v1004, %v1003
          %v1014 = vpack.c.bf16 %v1006, %v1005
          %v1015 = vld [vmem:[#allocation10] sm:$0xff]
          %v1016 = vld [vmem:[#allocation10 + $0x8] sm:$0xff]
          %v1017 = vld [vmem:[#allocation10 + $0x10] sm:$0xff]
          %v1018 = vld [vmem:[#allocation10 + $0x18] sm:$0xff]
          %v1019 = vld [vmem:[#allocation10 + $0x20] sm:$0xff]
          %v1020 = vld [vmem:[#allocation10 + $0x28] sm:$0xff]
          %v1021 = vld [vmem:[#allocation10 + $0x30] sm:$0xff]
          %v1022 = vld [vmem:[#allocation10 + $0x38] sm:$0xff]
          %v1023 = vld [vmem:[#allocation10 + $0x40] sm:$0xff]
          %v1024 = vld [vmem:[#allocation10 + $0x48] sm:$0xff]
          %v1025 = vld [vmem:[#allocation10 + $0x50] sm:$0xff]
          %v1026 = vld [vmem:[#allocation10 + $0x58] sm:$0xff]
          %v1027 = vld [vmem:[#allocation10 + $0x60] sm:$0xff]
          %v1028 = vld [vmem:[#allocation10 + $0x68] sm:$0xff]
          %v1029 = vld [vmem:[#allocation10 + $0x70] sm:$0xff]
          %v1030 = vld [vmem:[#allocation10 + $0x78] sm:$0xff]
          %v1047 = vunpack.c.l.b16 %v1015
          %v1048 = vunpack.c.h.b16 %v1015
          %v1049 = vunpack.c.l.b16 %v1016
          %v1050 = vunpack.c.h.b16 %v1016
          %v1051 = vunpack.c.l.b16 %v1017
          %v1052 = vunpack.c.h.b16 %v1017
          %v1053 = vunpack.c.l.b16 %v1018
          %v1054 = vunpack.c.h.b16 %v1018
          %v1055 = vunpack.c.l.b16 %v1019
          %v1056 = vunpack.c.h.b16 %v1019
          %v1057 = vunpack.c.l.b16 %v1020
          %v1058 = vunpack.c.h.b16 %v1020
          %v1059 = vunpack.c.l.b16 %v1021
          %v1060 = vunpack.c.h.b16 %v1021
          %v1061 = vunpack.c.l.b16 %v1022
          %v1062 = vunpack.c.h.b16 %v1022
          %v1063 = vunpack.c.l.b16 %v1023
          %v1064 = vunpack.c.h.b16 %v1023
          %v1065 = vunpack.c.l.b16 %v1024
          %v1066 = vunpack.c.h.b16 %v1024
          %v1067 = vunpack.c.l.b16 %v1025
          %v1068 = vunpack.c.h.b16 %v1025
          %v1069 = vunpack.c.l.b16 %v1026
          %v1070 = vunpack.c.h.b16 %v1026
          %v1071 = vunpack.c.l.b16 %v1027
          %v1072 = vunpack.c.h.b16 %v1027
          %v1073 = vunpack.c.l.b16 %v1028
          %v1074 = vunpack.c.h.b16 %v1028
          %v1075 = vunpack.c.l.b16 %v1029
          %v1076 = vunpack.c.h.b16 %v1029
          %v1077 = vunpack.c.l.b16 %v1030
          %v1078 = vunpack.c.h.b16 %v1030
          %v1079 = vpack.c.b16 %v1049, %v1047
          %v1080 = vpack.c.b16 %v1050, %v1048
          %v1081 = vpack.c.b16 %v1053, %v1051
          %v1082 = vpack.c.b16 %v1054, %v1052
          %v1083 = vpack.c.b16 %v1057, %v1055
          %v1084 = vpack.c.b16 %v1058, %v1056
          %v1085 = vpack.c.b16 %v1061, %v1059
          %v1086 = vpack.c.b16 %v1062, %v1060
          %v1087 = vpack.c.b16 %v1065, %v1063
          %v1088 = vpack.c.b16 %v1066, %v1064
          %v1089 = vpack.c.b16 %v1069, %v1067
          %v1090 = vpack.c.b16 %v1070, %v1068
          %v1091 = vpack.c.b16 %v1073, %v1071
          %v1092 = vpack.c.b16 %v1074, %v1072
          %v1093 = vpack.c.b16 %v1077, %v1075
          %v1094 = vpack.c.b16 %v1078, %v1076
          %1111 = vmatprep.subr.bf16.mxu0 %v1094
          %1112 = vmatpush1.bf16.msra.mxu0 %v1093
          %1113 = vmatprep.subr.bf16.mxu0 %v1092
          %1114 = vmatpush1.bf16.msra.mxu0 %v1091
          %1115 = vmatprep.subr.bf16.mxu0 %v1090
          %1116 = vmatpush1.bf16.msra.mxu0 %v1089
          %1117 = vmatprep.subr.bf16.mxu0 %v1088
          %1118 = vmatpush1.bf16.msra.mxu0 %v1087
          %1119 = vmatprep.subr.bf16.mxu0 %v1086
          %1120 = vmatpush1.bf16.msra.mxu0 %v1085
          %1121 = vmatprep.subr.bf16.mxu0 %v1084
          %1122 = vmatpush1.bf16.msra.mxu0 %v1083
          %1123 = vmatprep.subr.bf16.mxu0 %v1082
          %1124 = vmatpush1.bf16.msra.mxu0 %v1081
          %1125 = vmatprep.subr.bf16.mxu0 %v1080
          %1126 = vmatpush1.bf16.msra.mxu0 %v1079
          %1127 = vmatprep.subr.bf16.mxu0 0
          %1128 = vmatpush2.bf16.msra.mxu0 0
          %1129 = vmatprep.subr.bf16.mxu0 0
          %1130 = vmatpush2.bf16.msra.mxu0 0
          %1131 = vmatprep.subr.bf16.mxu0 0
          %1132 = vmatpush2.bf16.msra.mxu0 0
          %1133 = vmatprep.subr.bf16.mxu0 0
          %1134 = vmatpush2.bf16.msra.mxu0 0
          %1135 = vmatprep.subr.bf16.mxu0 0
          %1136 = vmatpush2.bf16.msra.mxu0 0
          %1137 = vmatprep.subr.bf16.mxu0 0
          %1138 = vmatpush2.bf16.msra.mxu0 0
          %1139 = vmatprep.subr.bf16.mxu0 0
          %1140 = vmatpush2.bf16.msra.mxu0 0
          %1141 = vmatprep.subr.bf16.mxu0 0
          %1142 = vmatpush2.bf16.msra.mxu0 0
          %1143 = vmatprep.mubr.bf16.mxu0 0
          %1144 = vmatmul.mubr.bf16.gmra.mxu0 %v1007
          %v1145 = vpop.f32.mrf.mxu0
          %v1146 = vadd.f32 0.0, %v1145
          %v1147 = vpop.f32.mrf.mxu0
          %v1148 = vadd.f32 0.0, %v1147
          %v1149 = vpop.f32.mrf.mxu0
          %v1150 = vadd.f32 0.0, %v1149
          %v1151 = vpop.f32.mrf.mxu0
          %v1152 = vadd.f32 0.0, %v1151
          %1153 = vmatprep.mubr.bf16.mxu0 0
          %1154 = vmatmul.mubr.bf16.gmra.mxu0 %v1008
          %v1155 = vpop.f32.mrf.mxu0
          %v1156 = vadd.f32 0.0, %v1155
          %v1157 = vpop.f32.mrf.mxu0
          %v1158 = vadd.f32 0.0, %v1157
          %v1159 = vpop.f32.mrf.mxu0
          %v1160 = vadd.f32 0.0, %v1159
          %v1161 = vpop.f32.mrf.mxu0
          %v1162 = vadd.f32 0.0, %v1161
          %1163 = vmatprep.mubr.bf16.mxu0 0
          %1164 = vmatmul.mubr.bf16.gmra.mxu0 %v1009
          %v1165 = vpop.f32.mrf.mxu0
          %v1166 = vadd.f32 0.0, %v1165
          %v1167 = vpop.f32.mrf.mxu0
          %v1168 = vadd.f32 0.0, %v1167
          %v1169 = vpop.f32.mrf.mxu0
          %v1170 = vadd.f32 0.0, %v1169
          %v1171 = vpop.f32.mrf.mxu0
          %v1172 = vadd.f32 0.0, %v1171
          %1173 = vmatprep.mubr.bf16.mxu0 0
          %1174 = vmatmul.mubr.bf16.gmra.mxu0 %v1010
          %v1175 = vpop.f32.mrf.mxu0
          %v1176 = vadd.f32 0.0, %v1175
          %v1177 = vpop.f32.mrf.mxu0
          %v1178 = vadd.f32 0.0, %v1177
          %v1179 = vpop.f32.mrf.mxu0
          %v1180 = vadd.f32 0.0, %v1179
          %v1181 = vpop.f32.mrf.mxu0
          %v1182 = vadd.f32 0.0, %v1181
          %1183 = vmatprep.mubr.bf16.mxu0 0
          %1184 = vmatmul.mubr.bf16.gmra.mxu0 %v1011
          %v1185 = vpop.f32.mrf.mxu0
          %v1186 = vadd.f32 0.0, %v1185
          %v1187 = vpop.f32.mrf.mxu0
          %v1188 = vadd.f32 0.0, %v1187
          %v1189 = vpop.f32.mrf.mxu0
          %v1190 = vadd.f32 0.0, %v1189
          %v1191 = vpop.f32.mrf.mxu0
          %v1192 = vadd.f32 0.0, %v1191
          %1193 = vmatprep.mubr.bf16.mxu0 0
          %1194 = vmatmul.mubr.bf16.gmra.mxu0 %v1012
          %v1195 = vpop.f32.mrf.mxu0
          %v1196 = vadd.f32 0.0, %v1195
          %v1197 = vpop.f32.mrf.mxu0
          %v1198 = vadd.f32 0.0, %v1197
          %v1199 = vpop.f32.mrf.mxu0
          %v1200 = vadd.f32 0.0, %v1199
          %v1201 = vpop.f32.mrf.mxu0
          %v1202 = vadd.f32 0.0, %v1201
          %1203 = vmatprep.mubr.bf16.mxu0 0
          %1204 = vmatmul.mubr.bf16.gmra.mxu0 %v1013
          %v1205 = vpop.f32.mrf.mxu0
          %v1206 = vadd.f32 0.0, %v1205
          %v1207 = vpop.f32.mrf.mxu0
          %v1208 = vadd.f32 0.0, %v1207
          %v1209 = vpop.f32.mrf.mxu0
          %v1210 = vadd.f32 0.0, %v1209
          %v1211 = vpop.f32.mrf.mxu0
          %v1212 = vadd.f32 0.0, %v1211
          %1213 = vmatprep.mubr.bf16.mxu0 0
          %1214 = vmatmul.mubr.bf16.gmra.mxu0 %v1014
          %v1215 = vpop.f32.mrf.mxu0
          %v1216 = vadd.f32 0.0, %v1215
          %v1217 = vpop.f32.mrf.mxu0
          %v1218 = vadd.f32 0.0, %v1217
          %v1219 = vpop.f32.mrf.mxu0
          %v1220 = vadd.f32 0.0, %v1219
          %v1221 = vpop.f32.mrf.mxu0
          %v1222 = vadd.f32 0.0, %v1221
          %1223 = vdwg.mxu0
          %1224 = vst [vmem:[%s375] sm:$0xff] %v1146
          %1225 = vst [vmem:[%s375 + $0x8] sm:$0xff] %v1148
          %1226 = vst [vmem:[%s375 + $0x10] sm:$0xff] %v1150
          %1227 = vst [vmem:[%s375 + $0x18] sm:$0xff] %v1152
          %1228 = vst [vmem:[%s375 + $0x20] sm:$0xff] %v1156
          %1229 = vst [vmem:[%s375 + $0x28] sm:$0xff] %v1158
          %1230 = vst [vmem:[%s375 + $0x30] sm:$0xff] %v1160
          %1231 = vst [vmem:[%s375 + $0x38] sm:$0xff] %v1162
          %1232 = vst [vmem:[%s375 + $0x40] sm:$0xff] %v1166
          %1233 = vst [vmem:[%s375 + $0x48] sm:$0xff] %v1168
          %1234 = vst [vmem:[%s375 + $0x50] sm:$0xff] %v1170
          %1235 = vst [vmem:[%s375 + $0x58] sm:$0xff] %v1172
          %1236 = vst [vmem:[%s375 + $0x60] sm:$0xff] %v1176
          %1237 = vst [vmem:[%s375 + $0x68] sm:$0xff] %v1178
          %1238 = vst [vmem:[%s375 + $0x70] sm:$0xff] %v1180
          %1239 = vst [vmem:[%s375 + $0x78] sm:$0xff] %v1182
          %1240 = vst [vmem:[%s375 + $0x80] sm:$0xff] %v1186
          %1241 = vst [vmem:[%s375 + $0x88] sm:$0xff] %v1188
          %1242 = vst [vmem:[%s375 + $0x90] sm:$0xff] %v1190
          %1243 = vst [vmem:[%s375 + $0x98] sm:$0xff] %v1192
          %1244 = vst [vmem:[%s375 + $0xa0] sm:$0xff] %v1196
          %1245 = vst [vmem:[%s375 + $0xa8] sm:$0xff] %v1198
          %1246 = vst [vmem:[%s375 + $0xb0] sm:$0xff] %v1200
          %1247 = vst [vmem:[%s375 + $0xb8] sm:$0xff] %v1202
          %1248 = vst [vmem:[%s375 + $0xc0] sm:$0xff] %v1206
          %1249 = vst [vmem:[%s375 + $0xc8] sm:$0xff] %v1208
          %1250 = vst [vmem:[%s375 + $0xd0] sm:$0xff] %v1210
          %1251 = vst [vmem:[%s375 + $0xd8] sm:$0xff] %v1212
          %1252 = vst [vmem:[%s375 + $0xe0] sm:$0xff] %v1216
          %1253 = vst [vmem:[%s375 + $0xe8] sm:$0xff] %v1218
          %1254 = vst [vmem:[%s375 + $0xf0] sm:$0xff] %v1220
          %1255 = vst [vmem:[%s375 + $0xf8] sm:$0xff] %v1222
        $region68: #{tpu_custom_call.1} parent=39 // pred_fallthru
          _
        %s1256 = sand.u32 %s176, 1
        %s1257 = scalar_lea.sflag [#allocation5], %s1256
        %s1258 = sand.u32 %s176, 1
        %s1259 = smul.addr %s1258, 256
        %s1260 = scalar_lea.vmem [#allocation11], %s1259
        // Predicated region
        $region69: #{tpu_custom_call.1} parent=39 // pred_check
          %p1261 = pneg %p186
        $region70: #{tpu_custom_call.1} parent=39 // pred_check_branch
          %1263 = sbr.rel (%p1261) target = $region72
        $region71: #{tpu_custom_call.1} parent=39 // pred_region
          %s1264 = smul.u32 16, %s29
          %s1266 = ssub.s32 4096, 4096
          %1267 = vsyncadd %s1257, %s1266
          %s1268 = smul.addr %s1264, 2
          %s1269 = smul.addr %s28, 64
          %s1270 = sadd.s32 %s1268, %s1269
          %s1271 = smul.addr %s1270, 128
          %s1272 = scalar_lea.hbm %s5, %s1271
          %s1273 = sshll.u32 %s1260, 4
          %s1274 = int_to_ptr.vmem [resolvable:$true] %s1273
          %1279 = dma.vmem_to_hbm [thread:$0]  %s1274, 4096, %s1272, %s1257, 256, 256, 16
        $region72: #{tpu_custom_call.1} parent=39 // pred_fallthru
          _
      $region40: #{tpu_custom_call.1} parent=5 // pred_fallthru
        _
      %p1280 = scmp.le.s32.totalorder 2, %s18
      // Predicated region
      $region73: #{tpu_custom_call.1} parent=5 // pred_check
        %p1281 = pneg %p1280
      $region74: #{tpu_custom_call.1} parent=5 // pred_check_branch
        %1283 = sbr.rel (%p1281) target = $region76
      $region75: #{tpu_custom_call.1} parent=5 // pred_region
        %s1284 = ssub.s32 %s18, 2
        // Predicated region
        $region77: #{tpu_custom_call.1} parent=75 // pred_check
          %p1285 = pneg %p192
        $region78: #{tpu_custom_call.1} parent=75 // pred_check_branch
          %1287 = sbr.rel (%p1285) target = $region80
        $region79: #{tpu_custom_call.1} parent=75 // pred_region
          %s1288 = sand.u32 %s177, 1
          %s1289 = scalar_lea.sflag [#allocation5], %s1288
          %s1290 = sand.u32 %s177, 1
          %s1291 = smul.addr %s1290, 256
          %s1292 = scalar_lea.vmem [#allocation11], %s1291
          %1293 = dma.done %s1289, 4096
        $region80: #{tpu_custom_call.1} parent=75 // pred_fallthru
          _
      $region76: #{tpu_custom_call.1} parent=5 // pred_fallthru
        _
    $region6: #{tpu_custom_call.1} parent=1 // loop_footer
      %s22 = sadd.s32 1, %s18
    $region7: #{tpu_custom_call.1} parent=1 // loop_footer_branch
      %17 = sbr.rel target = $region3
    $region8: #{tpu_custom_call.1} parent=1 // loop_exit
      _
    %1294 = vsyncpa [#allocation4], 1
    %s1295 = scalar_lea.sflag [#allocation4], 1
    %1296 = vsyncpa %s1295, 1
    %1297 = vsyncpa [#allocation7], 1
    %1298 = vsyncpa [#allocation5], 1
    %s1299 = scalar_lea.sflag [#allocation5], 1
    %1300 = vsyncpa %s1299, 1

</llo_original>
